<compile_context>
chip_gen: v7x
topology: tpu7x:2x2x1
jax: 0.10.0
libtpu: 0.0.40
codegen_flags: <defaults>
</compile_context>

<pallas_src>
import functools

import jax
import jax.numpy as jnp
from jax.experimental import pallas as pl
from jax.experimental.pallas import tpu as pltpu

_LN_EPS = 1e-5   # torch.nn.LayerNorm default
_BN_EPS = 1e-5   # torch.nn.BatchNorm1d default


# ---------------------------------------------------------------------------
# In-kernel math helpers
# ---------------------------------------------------------------------------
def _fast_recip(x):
    # EUP approximate reciprocal + one Newton step: keeps the divide off the
    # VALU slot while retaining ~float32 accuracy.
    r = pl.reciprocal(x, approx=True)
    return r * (2.0 - x * r)


def _erf(x):
    # Abramowitz & Stegun 7.1.26 rational approximation (|err| < 1.5e-7).
    # exp and the reciprocal land on the EUP slot; the polynomial is cheap VPU work.
    a1, a2, a3, a4, a5 = (0.254829592, -0.284496736, 1.421413741,
                          -1.453152027, 1.061405429)
    p = 0.3275911
    z = jnp.abs(x)
    t = _fast_recip(1.0 + p * z)
    poly = ((((a5 * t + a4) * t + a3) * t + a2) * t + a1) * t
    e = 1.0 - poly * jnp.exp(-z * z)
    return jnp.where(x >= 0, e, -e)


def _gelu(x):
    # Exact (erf-based) GELU, matching torch.nn.GELU() default.
    return 0.5 * x * (1.0 + _erf(x * 0.7071067811865476))


def _layernorm(x, gamma, beta):
    mu = jnp.mean(x, axis=-1, keepdims=True)
    var = jnp.mean(jnp.square(x - mu), axis=-1, keepdims=True)
    return (x - mu) * jax.lax.rsqrt(var + _LN_EPS) * gamma + beta


# ---------------------------------------------------------------------------
# Fused MLP kernel: one row-tile per grid step, all layers evaluated in VMEM.
# refs layout: x_ref, w0, b0, [gamma_j, beta_j, w_j, b_j]*n_hidden, o_ref
# ---------------------------------------------------------------------------
def _mlp_kernel(x_ref, *refs, n_hidden, final_act, compute_dtype):
    o_ref = refs[-1]
    p = refs[:-1]
    cd = compute_dtype

    x = x_ref[...]
    h = (jnp.dot(x.astype(cd), p[0][...].astype(cd),
                 preferred_element_type=jnp.float32) + p[1][...])
    idx = 2
    for _ in range(n_hidden):
        g, be, w, b = p[idx], p[idx + 1], p[idx + 2], p[idx + 3]
        idx += 4
        h = _gelu(h)
        h = _layernorm(h, g[...], be[...])
        h = (jnp.dot(h.astype(cd), w[...].astype(cd),
                     preferred_element_type=jnp.float32) + b[...])

    if final_act == "tanh":
        h = jnp.tanh(h)
    elif final_act == "gelu":
        h = _gelu(h)
    o_ref[...] = h.astype(o_ref.dtype)


# ---------------------------------------------------------------------------
# Wrapper: builds the grid / BlockSpecs and calls pallas_call once.
# ---------------------------------------------------------------------------
def nn_seq_bn_mlp_forward(seq, params, *, final_act=None, row_tile=512,
                          compute_dtype=jnp.float32, input_bn=None):
    """Forward pass of NnSeqBnMLP.

    seq:     [d0, d1, dims[0]]  (flattened to tokens = d0*d1 rows)
    params:  {"linears": [(w, b), ...]  with w stored as [in, out] (= torch W.T),
              "norms":   [(gamma, beta), ...]}  (LayerNorm per hidden layer)
    final_act: None | "tanh" | "gelu"   (the optional trailing activation)
    input_bn:  optional (mean, var, gamma, beta) of an eval-mode input BatchNorm1d.
    compute_dtype: jnp.float32 (default) or jnp.bfloat16 for the MXU operands
                   (accumulation stays f32; elementwise math stays f32).
    row_tile: rows per grid step — size per generation (halve for v7x's 64 MiB VMEM).
    """
    d0, d1, d_in = seq.shape
    n = d0 * d1
    x = seq.reshape(n, d_in)

    linears = [(w, b) for (w, b) in params["linears"]]
    norms = list(params["norms"])

    if input_bn is not None:
        # Fold eval-mode BatchNorm1d into the first Linear (affine transform).
        mean, var, gamma, beta = input_bn
        scale = gamma * jax.lax.rsqrt(var + _BN_EPS)
        w0, b0 = linears[0]
        linears[0] = (w0 * scale[:, None], b0 + (beta - mean * scale) @ w0)

    # Lane-dense output slab: pad the last Linear to a multiple of 128 columns.
    out_dim = linears[-1][0].shape[-1]
    out_pad = ((out_dim + 127) // 128) * 128
    w_last, b_last = linears[-1]
    linears[-1] = (jnp.pad(w_last, ((0, 0), (0, out_pad - out_dim))),
                   jnp.pad(b_last, ((0, 0), (0, out_pad - out_dim))))

    # Flatten params in kernel order.
    flat = [linears[0][0], linears[0][1]]
    for (g, be), (w, b) in zip(norms, linears[1:]):
        flat += [g, be, w, b]

    # Row tile: full array if small, otherwise a multiple of 8 sublanes.
    tm = n if n <= row_tile else max(8, (row_tile // 8) * 8)
    grid = (pl.cdiv(n, tm),)

    in_specs = [pl.BlockSpec((tm, d_in), lambda i: (i, 0))]
    for a in flat:
        in_specs.append(pl.BlockSpec(a.shape, lambda i: (0, 0)))  # VMEM-resident
    out_specs = pl.BlockSpec((tm, out_pad), lambda i: (i, 0))

    flops = 2 * n * sum(w.shape[0] * w.shape[1] for w, _ in linears)
    transc = n * sum(w.shape[1] for w, _ in linears[:-1])           # GELU exp
    if final_act in ("tanh", "gelu"):
        transc += n * out_pad
    bytes_accessed = 4 * (n * d_in + n * out_pad + sum(a.size for a in flat))

    kernel = functools.partial(_mlp_kernel, n_hidden=len(norms),
                               final_act=final_act, compute_dtype=compute_dtype)

    out = pl.pallas_call(
        kernel,
        out_shape=jax.ShapeDtypeStruct((n, out_pad), jnp.float32),
        grid=grid,
        in_specs=in_specs,
        out_specs=out_specs,
        compiler_params=pltpu.CompilerParams(
            dimension_semantics=("parallel",),          # rows are independent
            vmem_limit_bytes=48 * 1024 * 1024),         # headroom on v7x (64 MiB)
        cost_estimate=pl.CostEstimate(flops=flops, transcendentals=transc,
                                      bytes_accessed=bytes_accessed),
    )(x, *flat)

    return out[:, :out_dim].reshape(d0, d1, out_dim)


# ---------------------------------------------------------------------------
# Deterministic synthetic parameter initialization (mirrors the torch init).
# Weights are stored pre-transposed as [in, out] (= torch weight.T).
# ---------------------------------------------------------------------------
def _orthogonal(key, d_in, d_out, std=1.0):
    n, m = max(d_in, d_out), min(d_in, d_out)
    a = jax.random.normal(key, (n, m), jnp.float32)
    q, r = jnp.linalg.qr(a)
    q = q * jnp.sign(jnp.diagonal(r))[None, :]
    w = q if d_in >= d_out else q.T
    return (std * w[:d_in, :d_out]).astype(jnp.float32)


def init_params(key, dims):
    num_lin = len(dims) - 1
    keys = jax.random.split(key, num_lin)
    linears, norms = [], []
    for j in range(num_lin):
        d_i, d_o = dims[j], dims[j + 1]
        if j == num_lin - 1:
            # layer_init_with_orthogonal(std=0.1, bias_const=1e-6)
            w = _orthogonal(keys[j], d_i, d_o, std=0.1)
            b = jnp.full((1, d_o), 1e-6, jnp.float32)
        else:
            bound = 1.0 / d_i ** 0.5  # torch.nn.Linear default init
            kw, kb = jax.random.split(keys[j])
            w = jax.random.uniform(kw, (d_i, d_o), jnp.float32, -bound, bound)
            b = jax.random.uniform(kb, (1, d_o), jnp.float32, -bound, bound)
        linears.append((w, b))
        if j >= 1:  # LayerNorm(dims[j]) sits in front of linear j
            norms.append((jnp.ones((1, d_i), jnp.float32),
                          jnp.zeros((1, d_i), jnp.float32)))
    return {"linears": linears, "norms": norms}


# ---------------------------------------------------------------------------
# Pure-JAX reference (exact erf GELU) for correctness checking.
# ---------------------------------------------------------------------------
def _ref_forward(seq, params, *, final_act=None, input_bn=None):
    d0, d1, d_in = seq.shape
    x = seq.reshape(d0 * d1, d_in)
    if input_bn is not None:
        mean, var, gamma, beta = input_bn
        x = (x - mean) * gamma * jax.lax.rsqrt(var + _BN_EPS) + beta
    w0, b0 = params["linears"][0]
    h = x @ w0 + b0
    for (g, be), (w, b) in zip(params["norms"], params["linears"][1:]):
        h = jax.nn.gelu(h, approximate=False)
        mu = jnp.mean(h, -1, keepdims=True)
        var = jnp.mean((h - mu) ** 2, -1, keepdims=True)
        h = (h - mu) * jax.lax.rsqrt(var + _LN_EPS) * g + be
        h = h @ w + b
    if final_act == "tanh":
        h = jnp.tanh(h)
    elif final_act == "gelu":
        h = jax.nn.gelu(h, approximate=False)
    return h.reshape(d0, d1, -1)


if __name__ == "__main__":
    key = jax.random.PRNGKey(0)
    k_inp, k_p1, k_p2 = jax.random.split(key, 3)

    seq_len, batch = 16, 8                       # tokens = 128
    dims = (8, 32, 32, 4)                        # Linear + 2x(GELU,LN,Linear)
    seq = jax.random.normal(k_inp, (seq_len, batch, dims[0]), jnp.float32)

    # Config 1: trailing Tanh activation (last layer orthogonal std=0.1).
    params1 = init_params(k_p1, dims)
    fwd1 = jax.jit(functools.partial(nn_seq_bn_mlp_forward,
                                     final_act="tanh", row_tile=64))
    out1 = jax.block_until_ready(fwd1(seq, params1))
    ref1 = _ref_forward(seq, params1, final_act="tanh")
    assert out1.shape == (seq_len, batch, dims[-1]), out1.shape
    assert bool(jnp.all(jnp.isfinite(out1)))
    assert bool(jnp.all(jnp.abs(out1) <= 1.0))
    assert bool(jnp.max(jnp.abs(out1 - ref1)) < 2e-3), float(jnp.max(jnp.abs(out1 - ref1)))

    # Config 2: default module (activation=None), a single hidden layer.
    dims2 = (8, 32, 4)
    params2 = init_params(k_p2, dims2)
    fwd2 = jax.jit(functools.partial(nn_seq_bn_mlp_forward,
                                     final_act=None, row_tile=64))
    out2 = jax.block_until_ready(fwd2(seq, params2))
    ref2 = _ref_forward(seq, params2, final_act=None)
    assert out2.shape == (seq_len, batch, dims2[-1]), out2.shape
    assert bool(jnp.all(jnp.isfinite(out2)))
    assert bool(jnp.max(jnp.abs(out2 - ref2)) < 2e-3), float(jnp.max(jnp.abs(out2 - ref2)))

    print("KERNEL_OK")
</pallas_src>

<mosaic_0001>
module attributes {stable_mosaic.version = 11 : i64} {
  func.func @_mlp_kernel(%arg0: i32, %arg1: memref<64x8xf32, #tpu.memory_space<vmem>>, %arg2: memref<8x32xf32, #tpu.memory_space<vmem>>, %arg3: memref<1x32xf32, #tpu.memory_space<vmem>>, %arg4: memref<1x32xf32, #tpu.memory_space<vmem>>, %arg5: memref<1x32xf32, #tpu.memory_space<vmem>>, %arg6: memref<32x32xf32, #tpu.memory_space<vmem>>, %arg7: memref<1x32xf32, #tpu.memory_space<vmem>>, %arg8: memref<1x32xf32, #tpu.memory_space<vmem>>, %arg9: memref<1x32xf32, #tpu.memory_space<vmem>>, %arg10: memref<32x128xf32, #tpu.memory_space<vmem>>, %arg11: memref<1x128xf32, #tpu.memory_space<vmem>>, %arg12: memref<64x128xf32, #tpu.memory_space<vmem>>) attributes {dimension_semantics = [#tpu.dimension_semantics<parallel>], iteration_bounds = array<i64: 2>, scalar_prefetch = 0 : i64, scratch_operands = 0 : i64, tpu.core_type = #tpu.core_type<tc>, window_params = [{transform_indices = @transform_0, window_bounds = array<i64: 64, 8>}, {pipeline_mode = #tpu.pipeline_mode<synchronous>, transform_indices = @transform_1, window_bounds = array<i64: 8, 32>}, {pipeline_mode = #tpu.pipeline_mode<synchronous>, transform_indices = @transform_2, window_bounds = array<i64: 1, 32>}, {pipeline_mode = #tpu.pipeline_mode<synchronous>, transform_indices = @transform_3, window_bounds = array<i64: 1, 32>}, {pipeline_mode = #tpu.pipeline_mode<synchronous>, transform_indices = @transform_4, window_bounds = array<i64: 1, 32>}, {pipeline_mode = #tpu.pipeline_mode<synchronous>, transform_indices = @transform_5, window_bounds = array<i64: 32, 32>}, {pipeline_mode = #tpu.pipeline_mode<synchronous>, transform_indices = @transform_6, window_bounds = array<i64: 1, 32>}, {pipeline_mode = #tpu.pipeline_mode<synchronous>, transform_indices = @transform_7, window_bounds = array<i64: 1, 32>}, {pipeline_mode = #tpu.pipeline_mode<synchronous>, transform_indices = @transform_8, window_bounds = array<i64: 1, 32>}, {pipeline_mode = #tpu.pipeline_mode<synchronous>, transform_indices = @transform_9, window_bounds = array<i64: 32, 128>}, {pipeline_mode = #tpu.pipeline_mode<synchronous>, transform_indices = @transform_10, window_bounds = array<i64: 1, 128>}, {transform_indices = @transform_11, window_bounds = array<i64: 64, 128>}]} {
    %c0 = arith.constant 0 : index
    %c0_0 = arith.constant 0 : index
    %0 = vector.load %arg1[%c0, %c0_0] : memref<64x8xf32, #tpu.memory_space<vmem>>, vector<64x8xf32>
    %c0_1 = arith.constant 0 : index
    %c0_2 = arith.constant 0 : index
    %1 = vector.load %arg2[%c0_1, %c0_2] : memref<8x32xf32, #tpu.memory_space<vmem>>, vector<8x32xf32>
    %cst = arith.constant dense<0.000000e+00> : vector<64x32xf32>
    %2 = tpu.matmul %0, %1, %cst {dimension_numbers = #tpu.dot_dimension_numbers<[1], [0], [0], [1], [0, 0, 1, 1], [], []>} : vector<64x8xf32>, vector<8x32xf32>, vector<64x32xf32> -> vector<64x32xf32>
    %c0_3 = arith.constant 0 : index
    %c0_4 = arith.constant 0 : index
    %3 = vector.load %arg3[%c0_3, %c0_4] : memref<1x32xf32, #tpu.memory_space<vmem>>, vector<1x32xf32>
    %4 = vector.broadcast %3 : vector<1x32xf32> to vector<64x32xf32>
    %5 = arith.addf %2, %4 : vector<64x32xf32>
    %cst_5 = arith.constant 5.000000e-01 : f32
    %6 = vector.broadcast %cst_5 : f32 to vector<64x32xf32>
    %7 = arith.mulf %6, %5 : vector<64x32xf32>
    %cst_6 = arith.constant 0.707106769 : f32
    %8 = vector.broadcast %cst_6 : f32 to vector<64x32xf32>
    %9 = arith.mulf %5, %8 : vector<64x32xf32>
    %10 = math.absf %9 : vector<64x32xf32>
    %cst_7 = arith.constant 0.327591091 : f32
    %11 = vector.broadcast %cst_7 : f32 to vector<64x32xf32>
    %12 = arith.mulf %11, %10 : vector<64x32xf32>
    %cst_8 = arith.constant 1.000000e+00 : f32
    %13 = vector.broadcast %cst_8 : f32 to vector<64x32xf32>
    %14 = arith.addf %13, %12 : vector<64x32xf32>
    %15 = tpu.reciprocal %14 {approx = true} : vector<64x32xf32> -> vector<64x32xf32>
    %16 = arith.mulf %14, %15 : vector<64x32xf32>
    %cst_9 = arith.constant 2.000000e+00 : f32
    %17 = vector.broadcast %cst_9 : f32 to vector<64x32xf32>
    %18 = arith.subf %17, %16 : vector<64x32xf32>
    %19 = arith.mulf %15, %18 : vector<64x32xf32>
    %cst_10 = arith.constant 1.06140542 : f32
    %20 = vector.broadcast %cst_10 : f32 to vector<64x32xf32>
    %21 = arith.mulf %20, %19 : vector<64x32xf32>
    %cst_11 = arith.constant -1.45315206 : f32
    %22 = vector.broadcast %cst_11 : f32 to vector<64x32xf32>
    %23 = arith.addf %21, %22 : vector<64x32xf32>
    %24 = arith.mulf %23, %19 : vector<64x32xf32>
    %cst_12 = arith.constant 1.42141378 : f32
    %25 = vector.broadcast %cst_12 : f32 to vector<64x32xf32>
    %26 = arith.addf %24, %25 : vector<64x32xf32>
    %27 = arith.mulf %26, %19 : vector<64x32xf32>
    %cst_13 = arith.constant -0.284496725 : f32
    %28 = vector.broadcast %cst_13 : f32 to vector<64x32xf32>
    %29 = arith.addf %27, %28 : vector<64x32xf32>
    %30 = arith.mulf %29, %19 : vector<64x32xf32>
    %cst_14 = arith.constant 0.254829586 : f32
    %31 = vector.broadcast %cst_14 : f32 to vector<64x32xf32>
    %32 = arith.addf %30, %31 : vector<64x32xf32>
    %33 = arith.mulf %32, %19 : vector<64x32xf32>
    %cst_15 = arith.constant 0.000000e+00 : f32
    %34 = vector.broadcast %cst_15 : f32 to vector<64x32xf32>
    %35 = arith.subf %34, %10 : vector<64x32xf32>
    %36 = arith.mulf %35, %10 : vector<64x32xf32>
    %37 = math.exp %36 : vector<64x32xf32>
    %38 = arith.mulf %33, %37 : vector<64x32xf32>
    %cst_16 = arith.constant 1.000000e+00 : f32
    %39 = vector.broadcast %cst_16 : f32 to vector<64x32xf32>
    %40 = arith.subf %39, %38 : vector<64x32xf32>
    %cst_17 = arith.constant 0.000000e+00 : f32
    %41 = vector.broadcast %cst_17 : f32 to vector<64x32xf32>
    %42 = arith.cmpf oge, %9, %41 : vector<64x32xf32>
    %cst_18 = arith.constant 0.000000e+00 : f32
    %43 = vector.broadcast %cst_18 : f32 to vector<64x32xf32>
    %44 = arith.subf %43, %40 : vector<64x32xf32>
    %45 = arith.select %42, %40, %44 : vector<64x32xi1>, vector<64x32xf32>
    %cst_19 = arith.constant 1.000000e+00 : f32
    %46 = vector.broadcast %cst_19 : f32 to vector<64x32xf32>
    %47 = arith.addf %46, %45 : vector<64x32xf32>
    %48 = arith.mulf %7, %47 : vector<64x32xf32>
    %c0_20 = arith.constant 0 : index
    %c0_21 = arith.constant 0 : index
    %49 = vector.load %arg4[%c0_20, %c0_21] : memref<1x32xf32, #tpu.memory_space<vmem>>, vector<1x32xf32>
    %c0_22 = arith.constant 0 : index
    %c0_23 = arith.constant 0 : index
    %50 = vector.load %arg5[%c0_22, %c0_23] : memref<1x32xf32, #tpu.memory_space<vmem>>, vector<1x32xf32>
    %cst_24 = arith.constant dense<0.000000e+00> : vector<64xf32>
    %51 = vector.multi_reduction <add>, %48, %cst_24 [1] : vector<64x32xf32> to vector<64xf32>
    %52 = vector.shape_cast %51 : vector<64xf32> to vector<64x1xf32>
    %cst_25 = arith.constant 3.200000e+01 : f32
    %53 = vector.broadcast %cst_25 : f32 to vector<64x1xf32>
    %54 = arith.divf %52, %53 : vector<64x1xf32>
    %55 = vector.broadcast %54 : vector<64x1xf32> to vector<64x32xf32>
    %56 = arith.subf %48, %55 : vector<64x32xf32>
    %57 = arith.mulf %56, %56 : vector<64x32xf32>
    %cst_26 = arith.constant dense<0.000000e+00> : vector<64xf32>
    %58 = vector.multi_reduction <add>, %57, %cst_26 [1] : vector<64x32xf32> to vector<64xf32>
    %59 = vector.shape_cast %58 : vector<64xf32> to vector<64x1xf32>
    %cst_27 = arith.constant 3.200000e+01 : f32
    %60 = vector.broadcast %cst_27 : f32 to vector<64x1xf32>
    %61 = arith.divf %59, %60 : vector<64x1xf32>
    %62 = vector.broadcast %54 : vector<64x1xf32> to vector<64x32xf32>
    %63 = arith.subf %48, %62 : vector<64x32xf32>
    %cst_28 = arith.constant 9.99999974E-6 : f32
    %64 = vector.broadcast %cst_28 : f32 to vector<64x1xf32>
    %65 = arith.addf %61, %64 : vector<64x1xf32>
    %66 = math.rsqrt %65 : vector<64x1xf32>
    %67 = vector.broadcast %66 : vector<64x1xf32> to vector<64x32xf32>
    %68 = arith.mulf %63, %67 : vector<64x32xf32>
    %69 = vector.broadcast %49 : vector<1x32xf32> to vector<64x32xf32>
    %70 = arith.mulf %68, %69 : vector<64x32xf32>
    %71 = vector.broadcast %50 : vector<1x32xf32> to vector<64x32xf32>
    %72 = arith.addf %70, %71 : vector<64x32xf32>
    %c0_29 = arith.constant 0 : index
    %c0_30 = arith.constant 0 : index
    %73 = vector.load %arg6[%c0_29, %c0_30] : memref<32x32xf32, #tpu.memory_space<vmem>>, vector<32x32xf32>
    %cst_31 = arith.constant dense<0.000000e+00> : vector<64x32xf32>
    %74 = tpu.matmul %72, %73, %cst_31 {dimension_numbers = #tpu.dot_dimension_numbers<[1], [0], [0], [1], [0, 0, 1, 1], [], []>} : vector<64x32xf32>, vector<32x32xf32>, vector<64x32xf32> -> vector<64x32xf32>
    %c0_32 = arith.constant 0 : index
    %c0_33 = arith.constant 0 : index
    %75 = vector.load %arg7[%c0_32, %c0_33] : memref<1x32xf32, #tpu.memory_space<vmem>>, vector<1x32xf32>
    %76 = vector.broadcast %75 : vector<1x32xf32> to vector<64x32xf32>
    %77 = arith.addf %74, %76 : vector<64x32xf32>
    %cst_34 = arith.constant 5.000000e-01 : f32
    %78 = vector.broadcast %cst_34 : f32 to vector<64x32xf32>
    %79 = arith.mulf %78, %77 : vector<64x32xf32>
    %cst_35 = arith.constant 0.707106769 : f32
    %80 = vector.broadcast %cst_35 : f32 to vector<64x32xf32>
    %81 = arith.mulf %77, %80 : vector<64x32xf32>
    %82 = math.absf %81 : vector<64x32xf32>
    %cst_36 = arith.constant 0.327591091 : f32
    %83 = vector.broadcast %cst_36 : f32 to vector<64x32xf32>
    %84 = arith.mulf %83, %82 : vector<64x32xf32>
    %cst_37 = arith.constant 1.000000e+00 : f32
    %85 = vector.broadcast %cst_37 : f32 to vector<64x32xf32>
    %86 = arith.addf %85, %84 : vector<64x32xf32>
    %87 = tpu.reciprocal %86 {approx = true} : vector<64x32xf32> -> vector<64x32xf32>
    %88 = arith.mulf %86, %87 : vector<64x32xf32>
    %cst_38 = arith.constant 2.000000e+00 : f32
    %89 = vector.broadcast %cst_38 : f32 to vector<64x32xf32>
    %90 = arith.subf %89, %88 : vector<64x32xf32>
    %91 = arith.mulf %87, %90 : vector<64x32xf32>
    %cst_39 = arith.constant 1.06140542 : f32
    %92 = vector.broadcast %cst_39 : f32 to vector<64x32xf32>
    %93 = arith.mulf %92, %91 : vector<64x32xf32>
    %cst_40 = arith.constant -1.45315206 : f32
    %94 = vector.broadcast %cst_40 : f32 to vector<64x32xf32>
    %95 = arith.addf %93, %94 : vector<64x32xf32>
    %96 = arith.mulf %95, %91 : vector<64x32xf32>
    %cst_41 = arith.constant 1.42141378 : f32
    %97 = vector.broadcast %cst_41 : f32 to vector<64x32xf32>
    %98 = arith.addf %96, %97 : vector<64x32xf32>
    %99 = arith.mulf %98, %91 : vector<64x32xf32>
    %cst_42 = arith.constant -0.284496725 : f32
    %100 = vector.broadcast %cst_42 : f32 to vector<64x32xf32>
    %101 = arith.addf %99, %100 : vector<64x32xf32>
    %102 = arith.mulf %101, %91 : vector<64x32xf32>
    %cst_43 = arith.constant 0.254829586 : f32
    %103 = vector.broadcast %cst_43 : f32 to vector<64x32xf32>
    %104 = arith.addf %102, %103 : vector<64x32xf32>
    %105 = arith.mulf %104, %91 : vector<64x32xf32>
    %cst_44 = arith.constant 0.000000e+00 : f32
    %106 = vector.broadcast %cst_44 : f32 to vector<64x32xf32>
    %107 = arith.subf %106, %82 : vector<64x32xf32>
    %108 = arith.mulf %107, %82 : vector<64x32xf32>
    %109 = math.exp %108 : vector<64x32xf32>
    %110 = arith.mulf %105, %109 : vector<64x32xf32>
    %cst_45 = arith.constant 1.000000e+00 : f32
    %111 = vector.broadcast %cst_45 : f32 to vector<64x32xf32>
    %112 = arith.subf %111, %110 : vector<64x32xf32>
    %cst_46 = arith.constant 0.000000e+00 : f32
    %113 = vector.broadcast %cst_46 : f32 to vector<64x32xf32>
    %114 = arith.cmpf oge, %81, %113 : vector<64x32xf32>
    %cst_47 = arith.constant 0.000000e+00 : f32
    %115 = vector.broadcast %cst_47 : f32 to vector<64x32xf32>
    %116 = arith.subf %115, %112 : vector<64x32xf32>
    %117 = arith.select %114, %112, %116 : vector<64x32xi1>, vector<64x32xf32>
    %cst_48 = arith.constant 1.000000e+00 : f32
    %118 = vector.broadcast %cst_48 : f32 to vector<64x32xf32>
    %119 = arith.addf %118, %117 : vector<64x32xf32>
    %120 = arith.mulf %79, %119 : vector<64x32xf32>
    %c0_49 = arith.constant 0 : index
    %c0_50 = arith.constant 0 : index
    %121 = vector.load %arg8[%c0_49, %c0_50] : memref<1x32xf32, #tpu.memory_space<vmem>>, vector<1x32xf32>
    %c0_51 = arith.constant 0 : index
    %c0_52 = arith.constant 0 : index
    %122 = vector.load %arg9[%c0_51, %c0_52] : memref<1x32xf32, #tpu.memory_space<vmem>>, vector<1x32xf32>
    %cst_53 = arith.constant dense<0.000000e+00> : vector<64xf32>
    %123 = vector.multi_reduction <add>, %120, %cst_53 [1] : vector<64x32xf32> to vector<64xf32>
    %124 = vector.shape_cast %123 : vector<64xf32> to vector<64x1xf32>
    %cst_54 = arith.constant 3.200000e+01 : f32
    %125 = vector.broadcast %cst_54 : f32 to vector<64x1xf32>
    %126 = arith.divf %124, %125 : vector<64x1xf32>
    %127 = vector.broadcast %126 : vector<64x1xf32> to vector<64x32xf32>
    %128 = arith.subf %120, %127 : vector<64x32xf32>
    %129 = arith.mulf %128, %128 : vector<64x32xf32>
    %cst_55 = arith.constant dense<0.000000e+00> : vector<64xf32>
    %130 = vector.multi_reduction <add>, %129, %cst_55 [1] : vector<64x32xf32> to vector<64xf32>
    %131 = vector.shape_cast %130 : vector<64xf32> to vector<64x1xf32>
    %cst_56 = arith.constant 3.200000e+01 : f32
    %132 = vector.broadcast %cst_56 : f32 to vector<64x1xf32>
    %133 = arith.divf %131, %132 : vector<64x1xf32>
    %134 = vector.broadcast %126 : vector<64x1xf32> to vector<64x32xf32>
    %135 = arith.subf %120, %134 : vector<64x32xf32>
    %cst_57 = arith.constant 9.99999974E-6 : f32
    %136 = vector.broadcast %cst_57 : f32 to vector<64x1xf32>
    %137 = arith.addf %133, %136 : vector<64x1xf32>
    %138 = math.rsqrt %137 : vector<64x1xf32>
    %139 = vector.broadcast %138 : vector<64x1xf32> to vector<64x32xf32>
    %140 = arith.mulf %135, %139 : vector<64x32xf32>
    %141 = vector.broadcast %121 : vector<1x32xf32> to vector<64x32xf32>
    %142 = arith.mulf %140, %141 : vector<64x32xf32>
    %143 = vector.broadcast %122 : vector<1x32xf32> to vector<64x32xf32>
    %144 = arith.addf %142, %143 : vector<64x32xf32>
    %c0_58 = arith.constant 0 : index
    %c0_59 = arith.constant 0 : index
    %145 = vector.load %arg10[%c0_58, %c0_59] : memref<32x128xf32, #tpu.memory_space<vmem>>, vector<32x128xf32>
    %cst_60 = arith.constant dense<0.000000e+00> : vector<64x128xf32>
    %146 = tpu.matmul %144, %145, %cst_60 {dimension_numbers = #tpu.dot_dimension_numbers<[1], [0], [0], [1], [0, 0, 1, 1], [], []>} : vector<64x32xf32>, vector<32x128xf32>, vector<64x128xf32> -> vector<64x128xf32>
    %c0_61 = arith.constant 0 : index
    %c0_62 = arith.constant 0 : index
    %147 = vector.load %arg11[%c0_61, %c0_62] : memref<1x128xf32, #tpu.memory_space<vmem>>, vector<1x128xf32>
    %148 = vector.broadcast %147 : vector<1x128xf32> to vector<64x128xf32>
    %149 = arith.addf %146, %148 : vector<64x128xf32>
    %150 = math.tanh %149 : vector<64x128xf32>
    %c0_63 = arith.constant 0 : index
    %c0_64 = arith.constant 0 : index
    %151 = vector.load %arg12[%c0_63, %c0_64] : memref<64x128xf32, #tpu.memory_space<vmem>>, vector<64x128xf32>
    tpu.vector_store %arg12[%c0_63, %c0_64], %150 {strides = array<i32>} : memref<64x128xf32, #tpu.memory_space<vmem>>, vector<64x128xf32>,
    return
  }
  func.func @transform_0(%arg0: i32) -> (i32, i32) {
    %c0_i32 = arith.constant 0 : i32
    %c0_i32_0 = arith.constant 0 : i32
    return %arg0, %c0_i32 : i32, i32
  }
  func.func @transform_1(%arg0: i32) -> (i32, i32) {
    %c0_i32 = arith.constant 0 : i32
    %c0_i32_0 = arith.constant 0 : i32
    %c0_i32_1 = arith.constant 0 : i32
    return %c0_i32, %c0_i32_0 : i32, i32
  }
  func.func @transform_2(%arg0: i32) -> (i32, i32) {
    %c0_i32 = arith.constant 0 : i32
    %c0_i32_0 = arith.constant 0 : i32
    %c0_i32_1 = arith.constant 0 : i32
    return %c0_i32, %c0_i32_0 : i32, i32
  }
  func.func @transform_3(%arg0: i32) -> (i32, i32) {
    %c0_i32 = arith.constant 0 : i32
    %c0_i32_0 = arith.constant 0 : i32
    %c0_i32_1 = arith.constant 0 : i32
    return %c0_i32, %c0_i32_0 : i32, i32
  }
  func.func @transform_4(%arg0: i32) -> (i32, i32) {
    %c0_i32 = arith.constant 0 : i32
    %c0_i32_0 = arith.constant 0 : i32
    %c0_i32_1 = arith.constant 0 : i32
    return %c0_i32, %c0_i32_0 : i32, i32
  }
  func.func @transform_5(%arg0: i32) -> (i32, i32) {
    %c0_i32 = arith.constant 0 : i32
    %c0_i32_0 = arith.constant 0 : i32
    %c0_i32_1 = arith.constant 0 : i32
    return %c0_i32, %c0_i32_0 : i32, i32
  }
  func.func @transform_6(%arg0: i32) -> (i32, i32) {
    %c0_i32 = arith.constant 0 : i32
    %c0_i32_0 = arith.constant 0 : i32
    %c0_i32_1 = arith.constant 0 : i32
    return %c0_i32, %c0_i32_0 : i32, i32
  }
  func.func @transform_7(%arg0: i32) -> (i32, i32) {
    %c0_i32 = arith.constant 0 : i32
    %c0_i32_0 = arith.constant 0 : i32
    %c0_i32_1 = arith.constant 0 : i32
    return %c0_i32, %c0_i32_0 : i32, i32
  }
  func.func @transform_8(%arg0: i32) -> (i32, i32) {
    %c0_i32 = arith.constant 0 : i32
    %c0_i32_0 = arith.constant 0 : i32
    %c0_i32_1 = arith.constant 0 : i32
    return %c0_i32, %c0_i32_0 : i32, i32
  }
  func.func @transform_9(%arg0: i32) -> (i32, i32) {
    %c0_i32 = arith.constant 0 : i32
    %c0_i32_0 = arith.constant 0 : i32
    %c0_i32_1 = arith.constant 0 : i32
    return %c0_i32, %c0_i32_0 : i32, i32
  }
  func.func @transform_10(%arg0: i32) -> (i32, i32) {
    %c0_i32 = arith.constant 0 : i32
    %c0_i32_0 = arith.constant 0 : i32
    %c0_i32_1 = arith.constant 0 : i32
    return %c0_i32, %c0_i32_0 : i32, i32
  }
  func.func @transform_11(%arg0: i32) -> (i32, i32) {
    %c0_i32 = arith.constant 0 : i32
    %c0_i32_0 = arith.constant 0 : i32
    return %arg0, %c0_i32 : i32, i32
  }
}

</mosaic_0001>

<llo_original>
// kernel: nn_seq_bn_mlp_forward.1
$region0: #{nn_seq_bn_mlp_forward.1}
  #allocation0 [shape = 'u32[]', space=smem, size = 0x4, offset = 0x4, fixed_abs, tag = 'smem constant byte address 0x4 - core index']
  #allocation1 [shape = 'u32[144,128]{1,0:T(1,128)}', space=vmem, size = 0x12000, scoped, tag = 'internal scratch']
  %s0 = inlined_call_operand.vmem [shape: f32[128,8], index: 0, kind: input, shape index: {}]
  %s1 = inlined_call_operand.vmem [shape: f32[8,32], index: 1, kind: input, shape index: {}]
  %s2 = inlined_call_operand.vmem [shape: f32[1,32], index: 2, kind: input, shape index: {}]
  %s3 = inlined_call_operand.vmem [shape: f32[1,32], index: 3, kind: input, shape index: {}]
  %s4 = inlined_call_operand.vmem [shape: f32[1,32], index: 4, kind: input, shape index: {}]
  %s5 = inlined_call_operand.vmem [shape: f32[32,32], index: 5, kind: input, shape index: {}]
  %s6 = inlined_call_operand.vmem [shape: f32[1,32], index: 6, kind: input, shape index: {}]
  %s7 = inlined_call_operand.vmem [shape: f32[1,32], index: 7, kind: input, shape index: {}]
  %s8 = inlined_call_operand.vmem [shape: f32[1,32], index: 8, kind: input, shape index: {}]
  %s9 = inlined_call_operand.vmem [shape: f32[32,128], index: 9, kind: input, shape index: {}]
  %s10 = inlined_call_operand.vmem [shape: f32[1,128], index: 10, kind: input, shape index: {}]
  %s11 = inlined_call_operand.vmem [shape: f32[128,128], index: 11, kind: output, shape index: {}]
  %s12 = sld [smem:[#allocation0]]
  $region77: #{nn_seq_bn_mlp_forward.1} parent=0
    _
  %s14 = ssub.s32 1, %s12
  %s15 = scalar_select 0, %s14, %s12
  loop: start=0, step=1, limit=4
  $region2: #{nn_seq_bn_mlp_forward.1} parent=0 // loop_pre_header
    _
  $region3: #{nn_seq_bn_mlp_forward.1} parent=0 // loop_header
    %s17 = sphi 0, %s21
    %p18 = scmp.ge.s32.totalorder %s17, 4
    %s27 = sphi 0, %s29
    %s30 = sphi 0, %s27
    %s31 = sphi 0, %s30
    %s47 = sphi 0, %s31
    %s51 = sphi 0, %s51
    %s53 = sphi 0, %s51
    %s54 = sphi 0, %s53
    %s68 = sphi 0, %s54
    %s72 = sphi 0, %s72
    %s74 = sphi 0, %s72
    %s75 = sphi 0, %s74
    %s89 = sphi 0, %s75
    %s93 = sphi 0, %s93
    %s95 = sphi 0, %s93
    %s96 = sphi 0, %s95
    %s110 = sphi 0, %s96
    %s114 = sphi 0, %s114
    %s116 = sphi 0, %s114
    %s117 = sphi 0, %s116
    %s131 = sphi 0, %s117
    %s135 = sphi 0, %s135
    %s137 = sphi 0, %s135
    %s138 = sphi 0, %s137
    %s152 = sphi 0, %s138
    %s156 = sphi 0, %s156
    %s158 = sphi 0, %s156
    %s159 = sphi 0, %s158
    %s173 = sphi 0, %s159
    %s177 = sphi 0, %s177
    %s179 = sphi 0, %s177
    %s180 = sphi 0, %s179
    %s194 = sphi 0, %s180
    %s198 = sphi 0, %s198
    %s200 = sphi 0, %s198
    %s201 = sphi 0, %s200
    %s215 = sphi 0, %s201
    %s219 = sphi 0, %s219
    %s221 = sphi 0, %s219
    %s222 = sphi 0, %s221
    %s236 = sphi 0, %s222
    %s240 = sphi 0, %s240
    %s242 = sphi 0, %s240
    %s243 = sphi 0, %s242
    %s257 = sphi 0, %s243
    %s263 = sphi 0, %s265
    %s266 = sphi 0, %s263
    %s267 = sphi 0, %s266
    %s283 = sphi 0, %s267
  $region4: #{nn_seq_bn_mlp_forward.1} parent=0 // loop_header_branch
    %20 = sbr.rel (%p18) target = $region8
  $region5: #{nn_seq_bn_mlp_forward.1} parent=0 // loop_body
    %s22 = ssub.s32 %s17, 1
    %s23 = ssub.s32 %s17, 2
    %s24 = sadd.s32 %s17, 1
    %s25 = ssub.s32 %s17, %s24
    %p26 = scmp.eq.s32.totalorder %s25, 0
    %s28 = sadd.s32 %s27, 1
    %s29 = scalar_select %p26, %s27, %s28
    %p32 = pneg %p26
    %p33 = scmp.eq.s32.totalorder %s17, 1
    %p34 = por %p32, %p33
    %p35 = scmp.ne.s32.totalorder %s27, %s30
    %p36 = scmp.eq.s32.totalorder %s17, 0
    %p37 = por %p35, %p36
    %p38 = scmp.ne.s32.totalorder %s27, %s30
    %p39 = scmp.eq.s32.totalorder %s22, 1
    %p40 = por %p38, %p39
    %p41 = scmp.ne.s32.totalorder %s30, %s31
    %p42 = scmp.eq.s32.totalorder %s22, 0
    %p43 = por %p41, %p42
    %p44 = scmp.ne.s32.totalorder %s30, %s31
    %p45 = scmp.eq.s32.totalorder %s23, 1
    %p46 = por %p44, %p45
    %p48 = scmp.ne.s32.totalorder %s31, %s47
    %p49 = scmp.eq.s32.totalorder %s23, 0
    %p50 = por %p48, %p49
    %s52 = sadd.s32 %s51, 1
    %p55 = scmp.eq.s32.totalorder %s17, 1
    %p56 = scmp.ne.s32.totalorder %s51, %s53
    %p57 = scmp.eq.s32.totalorder %s17, 0
    %p58 = por %p56, %p57
    %p59 = scmp.ne.s32.totalorder %s51, %s53
    %p60 = scmp.eq.s32.totalorder %s22, 1
    %p61 = por %p59, %p60
    %p62 = scmp.ne.s32.totalorder %s53, %s54
    %p63 = scmp.eq.s32.totalorder %s22, 0
    %p64 = por %p62, %p63
    %p65 = scmp.ne.s32.totalorder %s53, %s54
    %p66 = scmp.eq.s32.totalorder %s23, 1
    %p67 = por %p65, %p66
    %p69 = scmp.ne.s32.totalorder %s54, %s68
    %p70 = scmp.eq.s32.totalorder %s23, 0
    %p71 = por %p69, %p70
    %s73 = sadd.s32 %s72, 1
    %p76 = scmp.eq.s32.totalorder %s17, 1
    %p77 = scmp.ne.s32.totalorder %s72, %s74
    %p78 = scmp.eq.s32.totalorder %s17, 0
    %p79 = por %p77, %p78
    %p80 = scmp.ne.s32.totalorder %s72, %s74
    %p81 = scmp.eq.s32.totalorder %s22, 1
    %p82 = por %p80, %p81
    %p83 = scmp.ne.s32.totalorder %s74, %s75
    %p84 = scmp.eq.s32.totalorder %s22, 0
    %p85 = por %p83, %p84
    %p86 = scmp.ne.s32.totalorder %s74, %s75
    %p87 = scmp.eq.s32.totalorder %s23, 1
    %p88 = por %p86, %p87
    %p90 = scmp.ne.s32.totalorder %s75, %s89
    %p91 = scmp.eq.s32.totalorder %s23, 0
    %p92 = por %p90, %p91
    %s94 = sadd.s32 %s93, 1
    %p97 = scmp.eq.s32.totalorder %s17, 1
    %p98 = scmp.ne.s32.totalorder %s93, %s95
    %p99 = scmp.eq.s32.totalorder %s17, 0
    %p100 = por %p98, %p99
    %p101 = scmp.ne.s32.totalorder %s93, %s95
    %p102 = scmp.eq.s32.totalorder %s22, 1
    %p103 = por %p101, %p102
    %p104 = scmp.ne.s32.totalorder %s95, %s96
    %p105 = scmp.eq.s32.totalorder %s22, 0
    %p106 = por %p104, %p105
    %p107 = scmp.ne.s32.totalorder %s95, %s96
    %p108 = scmp.eq.s32.totalorder %s23, 1
    %p109 = por %p107, %p108
    %p111 = scmp.ne.s32.totalorder %s96, %s110
    %p112 = scmp.eq.s32.totalorder %s23, 0
    %p113 = por %p111, %p112
    %s115 = sadd.s32 %s114, 1
    %p118 = scmp.eq.s32.totalorder %s17, 1
    %p119 = scmp.ne.s32.totalorder %s114, %s116
    %p120 = scmp.eq.s32.totalorder %s17, 0
    %p121 = por %p119, %p120
    %p122 = scmp.ne.s32.totalorder %s114, %s116
    %p123 = scmp.eq.s32.totalorder %s22, 1
    %p124 = por %p122, %p123
    %p125 = scmp.ne.s32.totalorder %s116, %s117
    %p126 = scmp.eq.s32.totalorder %s22, 0
    %p127 = por %p125, %p126
    %p128 = scmp.ne.s32.totalorder %s116, %s117
    %p129 = scmp.eq.s32.totalorder %s23, 1
    %p130 = por %p128, %p129
    %p132 = scmp.ne.s32.totalorder %s117, %s131
    %p133 = scmp.eq.s32.totalorder %s23, 0
    %p134 = por %p132, %p133
    %s136 = sadd.s32 %s135, 1
    %p139 = scmp.eq.s32.totalorder %s17, 1
    %p140 = scmp.ne.s32.totalorder %s135, %s137
    %p141 = scmp.eq.s32.totalorder %s17, 0
    %p142 = por %p140, %p141
    %p143 = scmp.ne.s32.totalorder %s135, %s137
    %p144 = scmp.eq.s32.totalorder %s22, 1
    %p145 = por %p143, %p144
    %p146 = scmp.ne.s32.totalorder %s137, %s138
    %p147 = scmp.eq.s32.totalorder %s22, 0
    %p148 = por %p146, %p147
    %p149 = scmp.ne.s32.totalorder %s137, %s138
    %p150 = scmp.eq.s32.totalorder %s23, 1
    %p151 = por %p149, %p150
    %p153 = scmp.ne.s32.totalorder %s138, %s152
    %p154 = scmp.eq.s32.totalorder %s23, 0
    %p155 = por %p153, %p154
    %s157 = sadd.s32 %s156, 1
    %p160 = scmp.eq.s32.totalorder %s17, 1
    %p161 = scmp.ne.s32.totalorder %s156, %s158
    %p162 = scmp.eq.s32.totalorder %s17, 0
    %p163 = por %p161, %p162
    %p164 = scmp.ne.s32.totalorder %s156, %s158
    %p165 = scmp.eq.s32.totalorder %s22, 1
    %p166 = por %p164, %p165
    %p167 = scmp.ne.s32.totalorder %s158, %s159
    %p168 = scmp.eq.s32.totalorder %s22, 0
    %p169 = por %p167, %p168
    %p170 = scmp.ne.s32.totalorder %s158, %s159
    %p171 = scmp.eq.s32.totalorder %s23, 1
    %p172 = por %p170, %p171
    %p174 = scmp.ne.s32.totalorder %s159, %s173
    %p175 = scmp.eq.s32.totalorder %s23, 0
    %p176 = por %p174, %p175
    %s178 = sadd.s32 %s177, 1
    %p181 = scmp.eq.s32.totalorder %s17, 1
    %p182 = scmp.ne.s32.totalorder %s177, %s179
    %p183 = scmp.eq.s32.totalorder %s17, 0
    %p184 = por %p182, %p183
    %p185 = scmp.ne.s32.totalorder %s177, %s179
    %p186 = scmp.eq.s32.totalorder %s22, 1
    %p187 = por %p185, %p186
    %p188 = scmp.ne.s32.totalorder %s179, %s180
    %p189 = scmp.eq.s32.totalorder %s22, 0
    %p190 = por %p188, %p189
    %p191 = scmp.ne.s32.totalorder %s179, %s180
    %p192 = scmp.eq.s32.totalorder %s23, 1
    %p193 = por %p191, %p192
    %p195 = scmp.ne.s32.totalorder %s180, %s194
    %p196 = scmp.eq.s32.totalorder %s23, 0
    %p197 = por %p195, %p196
    %s199 = sadd.s32 %s198, 1
    %p202 = scmp.eq.s32.totalorder %s17, 1
    %p203 = scmp.ne.s32.totalorder %s198, %s200
    %p204 = scmp.eq.s32.totalorder %s17, 0
    %p205 = por %p203, %p204
    %p206 = scmp.ne.s32.totalorder %s198, %s200
    %p207 = scmp.eq.s32.totalorder %s22, 1
    %p208 = por %p206, %p207
    %p209 = scmp.ne.s32.totalorder %s200, %s201
    %p210 = scmp.eq.s32.totalorder %s22, 0
    %p211 = por %p209, %p210
    %p212 = scmp.ne.s32.totalorder %s200, %s201
    %p213 = scmp.eq.s32.totalorder %s23, 1
    %p214 = por %p212, %p213
    %p216 = scmp.ne.s32.totalorder %s201, %s215
    %p217 = scmp.eq.s32.totalorder %s23, 0
    %p218 = por %p216, %p217
    %s220 = sadd.s32 %s219, 1
    %p223 = scmp.eq.s32.totalorder %s17, 1
    %p224 = scmp.ne.s32.totalorder %s219, %s221
    %p225 = scmp.eq.s32.totalorder %s17, 0
    %p226 = por %p224, %p225
    %p227 = scmp.ne.s32.totalorder %s219, %s221
    %p228 = scmp.eq.s32.totalorder %s22, 1
    %p229 = por %p227, %p228
    %p230 = scmp.ne.s32.totalorder %s221, %s222
    %p231 = scmp.eq.s32.totalorder %s22, 0
    %p232 = por %p230, %p231
    %p233 = scmp.ne.s32.totalorder %s221, %s222
    %p234 = scmp.eq.s32.totalorder %s23, 1
    %p235 = por %p233, %p234
    %p237 = scmp.ne.s32.totalorder %s222, %s236
    %p238 = scmp.eq.s32.totalorder %s23, 0
    %p239 = por %p237, %p238
    %s241 = sadd.s32 %s240, 1
    %p244 = scmp.eq.s32.totalorder %s17, 1
    %p245 = scmp.ne.s32.totalorder %s240, %s242
    %p246 = scmp.eq.s32.totalorder %s17, 0
    %p247 = por %p245, %p246
    %p248 = scmp.ne.s32.totalorder %s240, %s242
    %p249 = scmp.eq.s32.totalorder %s22, 1
    %p250 = por %p248, %p249
    %p251 = scmp.ne.s32.totalorder %s242, %s243
    %p252 = scmp.eq.s32.totalorder %s22, 0
    %p253 = por %p251, %p252
    %p254 = scmp.ne.s32.totalorder %s242, %s243
    %p255 = scmp.eq.s32.totalorder %s23, 1
    %p256 = por %p254, %p255
    %p258 = scmp.ne.s32.totalorder %s243, %s257
    %p259 = scmp.eq.s32.totalorder %s23, 0
    %p260 = por %p258, %p259
    %s261 = ssub.s32 %s17, %s24
    %p262 = scmp.eq.s32.totalorder %s261, 0
    %s264 = sadd.s32 %s263, 1
    %s265 = scalar_select %p262, %s263, %s264
    %p268 = pneg %p262
    %p269 = scmp.eq.s32.totalorder %s17, 1
    %p270 = por %p268, %p269
    %p271 = scmp.ne.s32.totalorder %s263, %s266
    %p272 = scmp.eq.s32.totalorder %s17, 0
    %p273 = por %p271, %p272
    %p274 = scmp.ne.s32.totalorder %s263, %s266
    %p275 = scmp.eq.s32.totalorder %s22, 1
    %p276 = por %p274, %p275
    %p277 = scmp.ne.s32.totalorder %s266, %s267
    %p278 = scmp.eq.s32.totalorder %s22, 0
    %p279 = por %p277, %p278
    %p280 = scmp.ne.s32.totalorder %s266, %s267
    %p281 = scmp.eq.s32.totalorder %s23, 1
    %p282 = por %p280, %p281
    %p284 = scmp.ne.s32.totalorder %s267, %s283
    %p285 = scmp.eq.s32.totalorder %s23, 0
    %p286 = por %p284, %p285
    %p287 = scmp.le.s32.totalorder 1, %s17
    %p288 = scmp.lt.s32.totalorder %s17, 3
    %p289 = pnand %p287, %p288
    %p290 = pneg %p289
    // Predicated region
    $region9: #{nn_seq_bn_mlp_forward.1} parent=5 // pred_check
      _
    $region10: #{nn_seq_bn_mlp_forward.1} parent=5 // pred_check_branch
      %292 = sbr.rel (%p289) target = $region12
    $region11: #{nn_seq_bn_mlp_forward.1} parent=5 // pred_region
      %s293 = ssub.s32 %s17, 1
      // Predicated region
      $region13: #{nn_seq_bn_mlp_forward.1} parent=11 // pred_check
        %p294 = pneg %p64
      $region14: #{nn_seq_bn_mlp_forward.1} parent=11 // pred_check_branch
        %296 = sbr.rel (%p294) target = $region16
      $region15: #{nn_seq_bn_mlp_forward.1} parent=11 // pred_region
        _
      $region16: #{nn_seq_bn_mlp_forward.1} parent=11 // pred_fallthru
        _
      // Predicated region
      $region17: #{nn_seq_bn_mlp_forward.1} parent=11 // pred_check
        %p297 = pneg %p85
      $region18: #{nn_seq_bn_mlp_forward.1} parent=11 // pred_check_branch
        %299 = sbr.rel (%p297) target = $region20
      $region19: #{nn_seq_bn_mlp_forward.1} parent=11 // pred_region
        _
      $region20: #{nn_seq_bn_mlp_forward.1} parent=11 // pred_fallthru
        _
      // Predicated region
      $region21: #{nn_seq_bn_mlp_forward.1} parent=11 // pred_check
        %p300 = pneg %p106
      $region22: #{nn_seq_bn_mlp_forward.1} parent=11 // pred_check_branch
        %302 = sbr.rel (%p300) target = $region24
      $region23: #{nn_seq_bn_mlp_forward.1} parent=11 // pred_region
        _
      $region24: #{nn_seq_bn_mlp_forward.1} parent=11 // pred_fallthru
        _
      // Predicated region
      $region25: #{nn_seq_bn_mlp_forward.1} parent=11 // pred_check
        %p303 = pneg %p127
      $region26: #{nn_seq_bn_mlp_forward.1} parent=11 // pred_check_branch
        %305 = sbr.rel (%p303) target = $region28
      $region27: #{nn_seq_bn_mlp_forward.1} parent=11 // pred_region
        _
      $region28: #{nn_seq_bn_mlp_forward.1} parent=11 // pred_fallthru
        _
      // Predicated region
      $region29: #{nn_seq_bn_mlp_forward.1} parent=11 // pred_check
        %p306 = pneg %p148
      $region30: #{nn_seq_bn_mlp_forward.1} parent=11 // pred_check_branch
        %308 = sbr.rel (%p306) target = $region32
      $region31: #{nn_seq_bn_mlp_forward.1} parent=11 // pred_region
        _
      $region32: #{nn_seq_bn_mlp_forward.1} parent=11 // pred_fallthru
        _
      // Predicated region
      $region33: #{nn_seq_bn_mlp_forward.1} parent=11 // pred_check
        %p309 = pneg %p169
      $region34: #{nn_seq_bn_mlp_forward.1} parent=11 // pred_check_branch
        %311 = sbr.rel (%p309) target = $region36
      $region35: #{nn_seq_bn_mlp_forward.1} parent=11 // pred_region
        _
      $region36: #{nn_seq_bn_mlp_forward.1} parent=11 // pred_fallthru
        _
      // Predicated region
      $region37: #{nn_seq_bn_mlp_forward.1} parent=11 // pred_check
        %p312 = pneg %p190
      $region38: #{nn_seq_bn_mlp_forward.1} parent=11 // pred_check_branch
        %314 = sbr.rel (%p312) target = $region40
      $region39: #{nn_seq_bn_mlp_forward.1} parent=11 // pred_region
        _
      $region40: #{nn_seq_bn_mlp_forward.1} parent=11 // pred_fallthru
        _
      // Predicated region
      $region41: #{nn_seq_bn_mlp_forward.1} parent=11 // pred_check
        %p315 = pneg %p211
      $region42: #{nn_seq_bn_mlp_forward.1} parent=11 // pred_check_branch
        %317 = sbr.rel (%p315) target = $region44
      $region43: #{nn_seq_bn_mlp_forward.1} parent=11 // pred_region
        _
      $region44: #{nn_seq_bn_mlp_forward.1} parent=11 // pred_fallthru
        _
      // Predicated region
      $region45: #{nn_seq_bn_mlp_forward.1} parent=11 // pred_check
        %p318 = pneg %p232
      $region46: #{nn_seq_bn_mlp_forward.1} parent=11 // pred_check_branch
        %320 = sbr.rel (%p318) target = $region48
      $region47: #{nn_seq_bn_mlp_forward.1} parent=11 // pred_region
        _
      $region48: #{nn_seq_bn_mlp_forward.1} parent=11 // pred_fallthru
        _
      // Predicated region
      $region49: #{nn_seq_bn_mlp_forward.1} parent=11 // pred_check
        %p321 = pneg %p253
      $region50: #{nn_seq_bn_mlp_forward.1} parent=11 // pred_check_branch
        %323 = sbr.rel (%p321) target = $region52
      $region51: #{nn_seq_bn_mlp_forward.1} parent=11 // pred_region
        _
      $region52: #{nn_seq_bn_mlp_forward.1} parent=11 // pred_fallthru
        _
    $region12: #{nn_seq_bn_mlp_forward.1} parent=5 // pred_fallthru
      _
    %p324 = scmp.lt.s32.totalorder %s17, 2
    // Predicated region
    $region53: #{nn_seq_bn_mlp_forward.1} parent=5 // pred_check
      %p325 = pneg %p324
    $region54: #{nn_seq_bn_mlp_forward.1} parent=5 // pred_check_branch
      %327 = sbr.rel (%p325) target = $region56
    $region55: #{nn_seq_bn_mlp_forward.1} parent=5 // pred_region
      // Predicated region
      $region57: #{nn_seq_bn_mlp_forward.1} parent=55 // pred_check
        %p328 = pneg %p37
      $region58: #{nn_seq_bn_mlp_forward.1} parent=55 // pred_check_branch
        %330 = sbr.rel (%p328) target = $region60
      $region59: #{nn_seq_bn_mlp_forward.1} parent=55 // pred_region
        %s331 = smul.u32 8, %s17
        %p332 = scmp.lt.s32.totalorder %s331, 15
        %s333 = scalar_select %p332, %s331, 15
        %s334 = smul.addr %s333, 8
        %s335 = scalar_lea.vmem %s0, %s334
        %s336 = smul.u32 8, %s17
      $region60: #{nn_seq_bn_mlp_forward.1} parent=55 // pred_fallthru
        _
    $region56: #{nn_seq_bn_mlp_forward.1} parent=5 // pred_fallthru
      _
    %p337 = scmp.le.s32.totalorder 1, %s17
    %p338 = scmp.lt.s32.totalorder %s17, 3
    %p339 = pnand %p337, %p338
    %p340 = pneg %p339
    // Predicated region
    $region61: #{nn_seq_bn_mlp_forward.1} parent=5 // pred_check
      _
    $region62: #{nn_seq_bn_mlp_forward.1} parent=5 // pred_check_branch
      %342 = sbr.rel (%p339) target = $region64
    $region63: #{nn_seq_bn_mlp_forward.1} parent=5 // pred_region
      %s343 = ssub.s32 %s17, 1
      %s344 = smul.u32 8, %s22
      %p345 = scmp.lt.s32.totalorder %s344, 15
      %s346 = scalar_select %p345, %s344, 15
      %s347 = smul.addr %s346, 8
      %s348 = scalar_lea.vmem %s0, %s347
      %p349 = pneg %p43
      %p350 = pneg %p40
      %p351 = pneg %p64
      %p352 = pneg %p61
      %p353 = pneg %p85
      %p354 = pneg %p82
      %p355 = pneg %p106
      %p356 = pneg %p103
      %p357 = pneg %p127
      %p358 = pneg %p124
      %p359 = pneg %p148
      %p360 = pneg %p145
      %p361 = pneg %p169
      %p362 = pneg %p166
      %p363 = pneg %p190
      %p364 = pneg %p187
      %p365 = pneg %p211
      %p366 = pneg %p208
      %p367 = pneg %p232
      %p368 = pneg %p229
      %p369 = pneg %p253
      %p370 = pneg %p250
      %p371 = pneg %p279
      %p372 = pneg %p276
      %s373 = smul.u32 8, %s22
      %p374 = scmp.lt.s32.totalorder %s373, 15
      %s375 = scalar_select %p374, %s373, 15
      %s376 = smul.addr %s375, 8
      %s377 = scalar_lea.vmem %s11, %s376
      %s378 = smul.u32 8, %s22
      %p379 = scmp.lt.s32.totalorder %s378, 15
      %s380 = scalar_select %p379, %s378, 15
      %s381 = smul.addr %s380, 8
      %s382 = scalar_lea.vmem %s0, %s381
      %s383 = smul.u32 8, %s22
      %s384 = smul.u32 8, %s22
      %p385 = scmp.lt.s32.totalorder %s384, 15
      %s386 = scalar_select %p385, %s384, 15
      %s387 = smul.addr %s386, 8
      %s388 = scalar_lea.vmem %s11, %s387
      %s389 = smul.u32 8, %s22
      %v390 = vld [vmem:[%s382] sm:$0xff]
      %v391 = vld [vmem:[%s382 + $0x8] sm:$0xff]
      %v392 = vld [vmem:[%s382 + $0x10] sm:$0xff]
      %v393 = vld [vmem:[%s382 + $0x18] sm:$0xff]
      %v394 = vld [vmem:[%s382 + $0x20] sm:$0xff]
      %v395 = vld [vmem:[%s382 + $0x28] sm:$0xff]
      %v396 = vld [vmem:[%s382 + $0x30] sm:$0xff]
      %v397 = vld [vmem:[%s382 + $0x38] sm:$0xff]
      %v398 = vld [vmem:[%s1] sm:$0xff]
      %v399 = vld [vmem:[%s2] sm:$0x1]
      %v401 = vlaneseq
      %v402 = vshrl.u32 %v401, 7
      %v403 = vsub.s32 0, %v402
      %v404 = vrot.slane %v399, %v403
      %vm406 = vcmask 64512
      %v408 = vsel %vm406, %v390, 0
      %v411 = vsel %vm406, %v391, 0
      %v414 = vsel %vm406, %v392, 0
      %v417 = vsel %vm406, %v393, 0
      %v420 = vsel %vm406, %v394, 0
      %v423 = vsel %vm406, %v395, 0
      %v426 = vsel %vm406, %v396, 0
      %v429 = vsel %vm406, %v397, 0
      %431 = vmatprep.subr.mxu0 0.0
      %432 = vmatpush1.msra.mxu0 %v398
      %433 = vmatprep.subr.mxu0 0.0
      %434 = vmatpush1.msra.mxu0 0.0
      %435 = vmatprep.subr.mxu0 0.0
      %436 = vmatpush1.msra.mxu0 0.0
      %437 = vmatprep.subr.mxu0 0.0
      %438 = vmatpush1.msra.mxu0 0.0
      %439 = vmatprep.subr.mxu0 0.0
      %440 = vmatpush1.msra.mxu0 0.0
      %441 = vmatprep.subr.mxu0 0.0
      %442 = vmatpush1.msra.mxu0 0.0
      %443 = vmatprep.subr.mxu0 0.0
      %444 = vmatpush1.msra.mxu0 0.0
      %445 = vmatprep.subr.mxu0 0.0
      %446 = vmatpush1.msra.mxu0 0.0
      %447 = vmatprep.subr.mxu0 0.0
      %448 = vmatpush1.msra.mxu0 0.0
      %449 = vmatprep.subr.mxu0 0.0
      %450 = vmatpush1.msra.mxu0 0.0
      %451 = vmatprep.subr.mxu0 0.0
      %452 = vmatpush1.msra.mxu0 0.0
      %453 = vmatprep.subr.mxu0 0.0
      %454 = vmatpush1.msra.mxu0 0.0
      %455 = vmatprep.subr.mxu0 0.0
      %456 = vmatpush1.msra.mxu0 0.0
      %457 = vmatprep.subr.mxu0 0.0
      %458 = vmatpush1.msra.mxu0 0.0
      %459 = vmatprep.subr.mxu0 0.0
      %460 = vmatpush1.msra.mxu0 0.0
      %461 = vmatprep.subr.mxu0 0.0
      %462 = vmatpush1.msra.mxu0 0.0
      %463 = vmatprep.subr.mxu0 0.0
      %464 = vmatpush1.msra.mxu0 0.0
      %465 = vmatprep.subr.mxu0 0.0
      %466 = vmatpush1.msra.mxu0 0.0
      %467 = vmatprep.subr.mxu0 0.0
      %468 = vmatpush1.msra.mxu0 0.0
      %469 = vmatprep.subr.mxu0 0.0
      %470 = vmatpush1.msra.mxu0 0.0
      %471 = vmatprep.subr.mxu0 0.0
      %472 = vmatpush1.msra.mxu0 0.0
      %473 = vmatprep.subr.mxu0 0.0
      %474 = vmatpush1.msra.mxu0 0.0
      %475 = vmatprep.subr.mxu0 0.0
      %476 = vmatpush1.msra.mxu0 0.0
      %477 = vmatprep.subr.mxu0 0.0
      %478 = vmatpush1.msra.mxu0 0.0
      %479 = vmatprep.subr.mxu0 0.0
      %480 = vmatpush1.msra.mxu0 0.0
      %481 = vmatprep.subr.mxu0 0.0
      %482 = vmatpush1.msra.mxu0 0.0
      %483 = vmatprep.subr.mxu0 0.0
      %484 = vmatpush1.msra.mxu0 0.0
      %485 = vmatprep.subr.mxu0 0.0
      %486 = vmatpush1.msra.mxu0 0.0
      %487 = vmatprep.subr.mxu0 0.0
      %488 = vmatpush1.msra.mxu0 0.0
      %489 = vmatprep.subr.mxu0 0.0
      %490 = vmatpush1.msra.mxu0 0.0
      %491 = vmatprep.subr.mxu0 0.0
      %492 = vmatpush1.msra.mxu0 0.0
      %493 = vmatprep.subr.mxu0 0.0
      %494 = vmatpush1.msra.mxu0 0.0
      %495 = vmatprep.mubr.f32.mxu0 0.0
      %496 = vmatmul.mubr.f32.gmra.mrb[0].mxu0 %v408
      %v497 = vpop.f32.mrb[0].mxu0
      %v498 = vadd.f32 %v404, %v497
      %v499 = vpop.f32.mrb[0].mxu0
      %500 = vmatprep.mubr.f32.mxu0 0.0
      %501 = vmatmul.mubr.f32.gmra.mrb[0].mxu0 %v411
      %v502 = vpop.f32.mrb[0].mxu0
      %v503 = vadd.f32 %v404, %v502
      %v504 = vpop.f32.mrb[0].mxu0
      %505 = vmatprep.mubr.f32.mxu0 0.0
      %506 = vmatmul.mubr.f32.gmra.mrb[0].mxu0 %v414
      %v507 = vpop.f32.mrb[0].mxu0
      %v508 = vadd.f32 %v404, %v507
      %v509 = vpop.f32.mrb[0].mxu0
      %510 = vmatprep.mubr.f32.mxu0 0.0
      %511 = vmatmul.mubr.f32.gmra.mrb[0].mxu0 %v417
      %v512 = vpop.f32.mrb[0].mxu0
      %v513 = vadd.f32 %v404, %v512
      %v514 = vpop.f32.mrb[0].mxu0
      %515 = vmatprep.mubr.f32.mxu0 0.0
      %516 = vmatmul.mubr.f32.gmra.mrb[0].mxu0 %v420
      %v517 = vpop.f32.mrb[0].mxu0
      %v518 = vadd.f32 %v404, %v517
      %v519 = vpop.f32.mrb[0].mxu0
      %520 = vmatprep.mubr.f32.mxu0 0.0
      %521 = vmatmul.mubr.f32.gmra.mrb[0].mxu0 %v423
      %v522 = vpop.f32.mrb[0].mxu0
      %v523 = vadd.f32 %v404, %v522
      %v524 = vpop.f32.mrb[0].mxu0
      %525 = vmatprep.mubr.f32.mxu0 0.0
      %526 = vmatmul.mubr.f32.gmra.mrb[0].mxu0 %v426
      %v527 = vpop.f32.mrb[0].mxu0
      %v528 = vadd.f32 %v404, %v527
      %v529 = vpop.f32.mrb[0].mxu0
      %530 = vmatprep.mubr.f32.mxu0 0.0
      %531 = vmatmul.mubr.f32.gmra.mrb[0].mxu0 %v429
      %v532 = vpop.f32.mrb[0].mxu0
      %v533 = vadd.f32 %v404, %v532
      %v534 = vpop.f32.mrb[0].mxu0
      %535 = vdwg.mxu0
      %v536 = vmul.f32 %v498, 0.5
      %v537 = vmul.f32 %v503, 0.5
      %v538 = vmul.f32 %v508, 0.5
      %v539 = vmul.f32 %v513, 0.5
      %v540 = vmul.f32 %v518, 0.5
      %v541 = vmul.f32 %v523, 0.5
      %v542 = vmul.f32 %v528, 0.5
      %v543 = vmul.f32 %v533, 0.5
      %v544 = vmul.f32 %v498, 0.70710677
      %v545 = vmul.f32 %v503, 0.70710677
      %v546 = vmul.f32 %v508, 0.70710677
      %v547 = vmul.f32 %v513, 0.70710677
      %v548 = vmul.f32 %v518, 0.70710677
      %v549 = vmul.f32 %v523, 0.70710677
      %v550 = vmul.f32 %v528, 0.70710677
      %v551 = vmul.f32 %v533, 0.70710677
      %v552 = vand.u32 2147483647, %v544
      %v553 = vand.u32 2147483647, %v545
      %v554 = vand.u32 2147483647, %v546
      %v555 = vand.u32 2147483647, %v547
      %v556 = vand.u32 2147483647, %v548
      %v557 = vand.u32 2147483647, %v549
      %v558 = vand.u32 2147483647, %v550
      %v559 = vand.u32 2147483647, %v551
      %v560 = vmul.f32 %v552, 0.3275911
      %v561 = vmul.f32 %v553, 0.3275911
      %v562 = vmul.f32 %v554, 0.3275911
      %v563 = vmul.f32 %v555, 0.3275911
      %v564 = vmul.f32 %v556, 0.3275911
      %v565 = vmul.f32 %v557, 0.3275911
      %v566 = vmul.f32 %v558, 0.3275911
      %v567 = vmul.f32 %v559, 0.3275911
      %v568 = vadd.f32 %v560, 1.0
      %v569 = vadd.f32 %v561, 1.0
      %v570 = vadd.f32 %v562, 1.0
      %v571 = vadd.f32 %v563, 1.0
      %v572 = vadd.f32 %v564, 1.0
      %v573 = vadd.f32 %v565, 1.0
      %v574 = vadd.f32 %v566, 1.0
      %v575 = vadd.f32 %v567, 1.0
      %v576 = vrcp.pop %v568
      %v577 = vrcp.pop %v569
      %v578 = vrcp.pop %v570
      %v579 = vrcp.pop %v571
      %v580 = vrcp.pop %v572
      %v581 = vrcp.pop %v573
      %v582 = vrcp.pop %v574
      %v583 = vrcp.pop %v575
      %v584 = vmul.f32 %v568, %v576
      %v585 = vmul.f32 %v569, %v577
      %v586 = vmul.f32 %v570, %v578
      %v587 = vmul.f32 %v571, %v579
      %v588 = vmul.f32 %v572, %v580
      %v589 = vmul.f32 %v573, %v581
      %v590 = vmul.f32 %v574, %v582
      %v591 = vmul.f32 %v575, %v583
      %v592 = vsub.f32 2.0, %v584
      %v593 = vsub.f32 2.0, %v585
      %v594 = vsub.f32 2.0, %v586
      %v595 = vsub.f32 2.0, %v587
      %v596 = vsub.f32 2.0, %v588
      %v597 = vsub.f32 2.0, %v589
      %v598 = vsub.f32 2.0, %v590
      %v599 = vsub.f32 2.0, %v591
      %v600 = vmul.f32 %v576, %v592
      %v601 = vmul.f32 %v577, %v593
      %v602 = vmul.f32 %v578, %v594
      %v603 = vmul.f32 %v579, %v595
      %v604 = vmul.f32 %v580, %v596
      %v605 = vmul.f32 %v581, %v597
      %v606 = vmul.f32 %v582, %v598
      %v607 = vmul.f32 %v583, %v599
      %v608 = vmul.f32 %v600, 1.0614054
      %v609 = vmul.f32 %v601, 1.0614054
      %v610 = vmul.f32 %v602, 1.0614054
      %v611 = vmul.f32 %v603, 1.0614054
      %v612 = vmul.f32 %v604, 1.0614054
      %v613 = vmul.f32 %v605, 1.0614054
      %v614 = vmul.f32 %v606, 1.0614054
      %v615 = vmul.f32 %v607, 1.0614054
      %v616 = vadd.f32 %v608, -1.4531521
      %v617 = vadd.f32 %v609, -1.4531521
      %v618 = vadd.f32 %v610, -1.4531521
      %v619 = vadd.f32 %v611, -1.4531521
      %v620 = vadd.f32 %v612, -1.4531521
      %v621 = vadd.f32 %v613, -1.4531521
      %v622 = vadd.f32 %v614, -1.4531521
      %v623 = vadd.f32 %v615, -1.4531521
      %v624 = vmul.f32 %v616, %v600
      %v625 = vmul.f32 %v617, %v601
      %v626 = vmul.f32 %v618, %v602
      %v627 = vmul.f32 %v619, %v603
      %v628 = vmul.f32 %v620, %v604
      %v629 = vmul.f32 %v621, %v605
      %v630 = vmul.f32 %v622, %v606
      %v631 = vmul.f32 %v623, %v607
      %v632 = vadd.f32 %v624, 1.4214138
      %v633 = vadd.f32 %v625, 1.4214138
      %v634 = vadd.f32 %v626, 1.4214138
      %v635 = vadd.f32 %v627, 1.4214138
      %v636 = vadd.f32 %v628, 1.4214138
      %v637 = vadd.f32 %v629, 1.4214138
      %v638 = vadd.f32 %v630, 1.4214138
      %v639 = vadd.f32 %v631, 1.4214138
      %v640 = vmul.f32 %v632, %v600
      %v641 = vmul.f32 %v633, %v601
      %v642 = vmul.f32 %v634, %v602
      %v643 = vmul.f32 %v635, %v603
      %v644 = vmul.f32 %v636, %v604
      %v645 = vmul.f32 %v637, %v605
      %v646 = vmul.f32 %v638, %v606
      %v647 = vmul.f32 %v639, %v607
      %v648 = vadd.f32 %v640, -0.28449672
      %v649 = vadd.f32 %v641, -0.28449672
      %v650 = vadd.f32 %v642, -0.28449672
      %v651 = vadd.f32 %v643, -0.28449672
      %v652 = vadd.f32 %v644, -0.28449672
      %v653 = vadd.f32 %v645, -0.28449672
      %v654 = vadd.f32 %v646, -0.28449672
      %v655 = vadd.f32 %v647, -0.28449672
      %v656 = vmul.f32 %v648, %v600
      %v657 = vmul.f32 %v649, %v601
      %v658 = vmul.f32 %v650, %v602
      %v659 = vmul.f32 %v651, %v603
      %v660 = vmul.f32 %v652, %v604
      %v661 = vmul.f32 %v653, %v605
      %v662 = vmul.f32 %v654, %v606
      %v663 = vmul.f32 %v655, %v607
      %v664 = vadd.f32 %v656, 0.2548296
      %v665 = vadd.f32 %v657, 0.2548296
      %v666 = vadd.f32 %v658, 0.2548296
      %v667 = vadd.f32 %v659, 0.2548296
      %v668 = vadd.f32 %v660, 0.2548296
      %v669 = vadd.f32 %v661, 0.2548296
      %v670 = vadd.f32 %v662, 0.2548296
      %v671 = vadd.f32 %v663, 0.2548296
      %v672 = vmul.f32 %v664, %v600
      %v673 = vmul.f32 %v665, %v601
      %v674 = vmul.f32 %v666, %v602
      %v675 = vmul.f32 %v667, %v603
      %v676 = vmul.f32 %v668, %v604
      %v677 = vmul.f32 %v669, %v605
      %v678 = vmul.f32 %v670, %v606
      %v679 = vmul.f32 %v671, %v607
      %v680 = vsub.f32 0.0, %v552
      %v681 = vsub.f32 0.0, %v553
      %v682 = vsub.f32 0.0, %v554
      %v683 = vsub.f32 0.0, %v555
      %v684 = vsub.f32 0.0, %v556
      %v685 = vsub.f32 0.0, %v557
      %v686 = vsub.f32 0.0, %v558
      %v687 = vsub.f32 0.0, %v559
      %v688 = vmul.f32 %v680, %v552
      %v689 = vmul.f32 %v681, %v553
      %v690 = vmul.f32 %v682, %v554
      %v691 = vmul.f32 %v683, %v555
      %v692 = vmul.f32 %v684, %v556
      %v693 = vmul.f32 %v685, %v557
      %v694 = vmul.f32 %v686, %v558
      %v695 = vmul.f32 %v687, %v559
      %v696 = vmul.f32 %v688, 1.442695
      %v697 = vpow.pop %v696
      %v698 = vmul.f32 %v689, 1.442695
      %v699 = vpow.pop %v698
      %v700 = vmul.f32 %v690, 1.442695
      %v701 = vpow.pop %v700
      %v702 = vmul.f32 %v691, 1.442695
      %v703 = vpow.pop %v702
      %v704 = vmul.f32 %v692, 1.442695
      %v705 = vpow.pop %v704
      %v706 = vmul.f32 %v693, 1.442695
      %v707 = vpow.pop %v706
      %v708 = vmul.f32 %v694, 1.442695
      %v709 = vpow.pop %v708
      %v710 = vmul.f32 %v695, 1.442695
      %v711 = vpow.pop %v710
      %v712 = vmul.f32 %v672, %v697
      %v713 = vmul.f32 %v673, %v699
      %v714 = vmul.f32 %v674, %v701
      %v715 = vmul.f32 %v675, %v703
      %v716 = vmul.f32 %v676, %v705
      %v717 = vmul.f32 %v677, %v707
      %v718 = vmul.f32 %v678, %v709
      %v719 = vmul.f32 %v679, %v711
      %v720 = vsub.f32 1.0, %v712
      %v721 = vsub.f32 1.0, %v713
      %v722 = vsub.f32 1.0, %v714
      %v723 = vsub.f32 1.0, %v715
      %v724 = vsub.f32 1.0, %v716
      %v725 = vsub.f32 1.0, %v717
      %v726 = vsub.f32 1.0, %v718
      %v727 = vsub.f32 1.0, %v719
      %vm728 = vcmp.ge.f32.partialorder %v544, 0.0
      %vm729 = vcmp.ge.f32.partialorder %v545, 0.0
      %vm730 = vcmp.ge.f32.partialorder %v546, 0.0
      %vm731 = vcmp.ge.f32.partialorder %v547, 0.0
      %vm732 = vcmp.ge.f32.partialorder %v548, 0.0
      %vm733 = vcmp.ge.f32.partialorder %v549, 0.0
      %vm734 = vcmp.ge.f32.partialorder %v550, 0.0
      %vm735 = vcmp.ge.f32.partialorder %v551, 0.0
      %v736 = vsub.f32 0.0, %v720
      %v737 = vsub.f32 0.0, %v721
      %v738 = vsub.f32 0.0, %v722
      %v739 = vsub.f32 0.0, %v723
      %v740 = vsub.f32 0.0, %v724
      %v741 = vsub.f32 0.0, %v725
      %v742 = vsub.f32 0.0, %v726
      %v743 = vsub.f32 0.0, %v727
      %v744 = vsel %vm728, %v720, %v736
      %v745 = vsel %vm729, %v721, %v737
      %v746 = vsel %vm730, %v722, %v738
      %v747 = vsel %vm731, %v723, %v739
      %v748 = vsel %vm732, %v724, %v740
      %v749 = vsel %vm733, %v725, %v741
      %v750 = vsel %vm734, %v726, %v742
      %v751 = vsel %vm735, %v727, %v743
      %v752 = vadd.f32 %v744, 1.0
      %v753 = vadd.f32 %v745, 1.0
      %v754 = vadd.f32 %v746, 1.0
      %v755 = vadd.f32 %v747, 1.0
      %v756 = vadd.f32 %v748, 1.0
      %v757 = vadd.f32 %v749, 1.0
      %v758 = vadd.f32 %v750, 1.0
      %v759 = vadd.f32 %v751, 1.0
      %v760 = vmul.f32 %v536, %v752
      %v761 = vmul.f32 %v537, %v753
      %v762 = vmul.f32 %v538, %v754
      %v763 = vmul.f32 %v539, %v755
      %v764 = vmul.f32 %v540, %v756
      %v765 = vmul.f32 %v541, %v757
      %v766 = vmul.f32 %v542, %v758
      %v767 = vmul.f32 %v543, %v759
      %v768 = vld [vmem:[%s3] sm:$0x1]
      %v769 = vld [vmem:[%s4] sm:$0x1]
      %vm770 = vcmask 261120
      %v771 = vsel %vm770, %v760, 0.0
      %772 = vadd.xlane.f32.xlu0 %v771
      %v773 = vpop.xlane.xlu0 %772
      %v774 = vsel %vm770, %v761, 0.0
      %775 = vadd.xlane.f32.xlu0 %v774
      %v776 = vpop.xlane.xlu0 %775
      %v777 = vsel %vm770, %v762, 0.0
      %778 = vadd.xlane.f32.xlu0 %v777
      %v779 = vpop.xlane.xlu0 %778
      %v780 = vsel %vm770, %v763, 0.0
      %781 = vadd.xlane.f32.xlu0 %v780
      %v782 = vpop.xlane.xlu0 %781
      %v783 = vsel %vm770, %v764, 0.0
      %784 = vadd.xlane.f32.xlu0 %v783
      %v785 = vpop.xlane.xlu0 %784
      %v786 = vsel %vm770, %v765, 0.0
      %787 = vadd.xlane.f32.xlu0 %v786
      %v788 = vpop.xlane.xlu0 %787
      %v789 = vsel %vm770, %v766, 0.0
      %790 = vadd.xlane.f32.xlu0 %v789
      %v791 = vpop.xlane.xlu0 %790
      %v792 = vsel %vm770, %v767, 0.0
      %793 = vadd.xlane.f32.xlu0 %v792
      %v794 = vpop.xlane.xlu0 %793
      %v795 = vrcp.pop 32.0
      %v796 = vmul.f32 %v773, %v795
      %v797 = vmul.f32 %v776, %v795
      %v798 = vmul.f32 %v779, %v795
      %v799 = vmul.f32 %v782, %v795
      %v800 = vmul.f32 %v785, %v795
      %v801 = vmul.f32 %v788, %v795
      %v802 = vmul.f32 %v791, %v795
      %v803 = vmul.f32 %v794, %v795
      %v804 = vsub.f32 %v760, %v796
      %v805 = vsub.f32 %v761, %v797
      %v806 = vsub.f32 %v762, %v798
      %v807 = vsub.f32 %v763, %v799
      %v808 = vsub.f32 %v764, %v800
      %v809 = vsub.f32 %v765, %v801
      %v810 = vsub.f32 %v766, %v802
      %v811 = vsub.f32 %v767, %v803
      %v812 = vmul.f32 %v804, %v804
      %v813 = vmul.f32 %v805, %v805
      %v814 = vmul.f32 %v806, %v806
      %v815 = vmul.f32 %v807, %v807
      %v816 = vmul.f32 %v808, %v808
      %v817 = vmul.f32 %v809, %v809
      %v818 = vmul.f32 %v810, %v810
      %v819 = vmul.f32 %v811, %v811
      %v820 = vsel %vm770, %v812, 0.0
      %821 = vadd.xlane.f32.xlu0 %v820
      %v822 = vpop.xlane.xlu0 %821
      %v823 = vsel %vm770, %v813, 0.0
      %824 = vadd.xlane.f32.xlu0 %v823
      %v825 = vpop.xlane.xlu0 %824
      %v826 = vsel %vm770, %v814, 0.0
      %827 = vadd.xlane.f32.xlu0 %v826
      %v828 = vpop.xlane.xlu0 %827
      %v829 = vsel %vm770, %v815, 0.0
      %830 = vadd.xlane.f32.xlu0 %v829
      %v831 = vpop.xlane.xlu0 %830
      %v832 = vsel %vm770, %v816, 0.0
      %833 = vadd.xlane.f32.xlu0 %v832
      %v834 = vpop.xlane.xlu0 %833
      %v835 = vsel %vm770, %v817, 0.0
      %836 = vadd.xlane.f32.xlu0 %v835
      %v837 = vpop.xlane.xlu0 %836
      %v838 = vsel %vm770, %v818, 0.0
      %839 = vadd.xlane.f32.xlu0 %v838
      %v840 = vpop.xlane.xlu0 %839
      %v841 = vsel %vm770, %v819, 0.0
      %842 = vadd.xlane.f32.xlu0 %v841
      %v843 = vpop.xlane.xlu0 %842
      %v844 = vmul.f32 %v822, %v795
      %v845 = vmul.f32 %v825, %v795
      %v846 = vmul.f32 %v828, %v795
      %v847 = vmul.f32 %v831, %v795
      %v848 = vmul.f32 %v834, %v795
      %v849 = vmul.f32 %v837, %v795
      %v850 = vmul.f32 %v840, %v795
      %v851 = vmul.f32 %v843, %v795
      %v852 = vadd.f32 %v844, 1e-05
      %v853 = vadd.f32 %v845, 1e-05
      %v854 = vadd.f32 %v846, 1e-05
      %v855 = vadd.f32 %v847, 1e-05
      %v856 = vadd.f32 %v848, 1e-05
      %v857 = vadd.f32 %v849, 1e-05
      %v858 = vadd.f32 %v850, 1e-05
      %v859 = vadd.f32 %v851, 1e-05
      %v860 = vrsqrt.pop %v852
      %v861 = vrsqrt.pop %v853
      %v862 = vrsqrt.pop %v854
      %v863 = vrsqrt.pop %v855
      %v864 = vrsqrt.pop %v856
      %v865 = vrsqrt.pop %v857
      %v866 = vrsqrt.pop %v858
      %v867 = vrsqrt.pop %v859
      %v868 = vmul.f32 %v804, %v860
      %v869 = vmul.f32 %v805, %v861
      %v870 = vmul.f32 %v806, %v862
      %v871 = vmul.f32 %v807, %v863
      %v872 = vmul.f32 %v808, %v864
      %v873 = vmul.f32 %v809, %v865
      %v874 = vmul.f32 %v810, %v866
      %v875 = vmul.f32 %v811, %v867
      %v877 = vlaneseq
      %v878 = vshrl.u32 %v877, 7
      %v879 = vsub.s32 0, %v878
      %v880 = vrot.slane %v768, %v879
      %v882 = vmul.f32 %v868, %v880
      %v883 = vmul.f32 %v869, %v880
      %v884 = vmul.f32 %v870, %v880
      %v885 = vmul.f32 %v871, %v880
      %v886 = vmul.f32 %v872, %v880
      %v887 = vmul.f32 %v873, %v880
      %v888 = vmul.f32 %v874, %v880
      %v889 = vmul.f32 %v875, %v880
      %v891 = vlaneseq
      %v892 = vshrl.u32 %v891, 7
      %v893 = vsub.s32 0, %v892
      %v894 = vrot.slane %v769, %v893
      %v896 = vadd.f32 %v882, %v894
      %v897 = vadd.f32 %v883, %v894
      %v898 = vadd.f32 %v884, %v894
      %v899 = vadd.f32 %v885, %v894
      %v900 = vadd.f32 %v886, %v894
      %v901 = vadd.f32 %v887, %v894
      %v902 = vadd.f32 %v888, %v894
      %v903 = vadd.f32 %v889, %v894
      %v904 = vld [vmem:[%s5] sm:$0xff]
      %v905 = vld [vmem:[%s5 + $0x8] sm:$0xff]
      %v906 = vld [vmem:[%s5 + $0x10] sm:$0xff]
      %v907 = vld [vmem:[%s5 + $0x18] sm:$0xff]
      %v908 = vld [vmem:[%s6] sm:$0x1]
      %v910 = vlaneseq
      %v911 = vshrl.u32 %v910, 7
      %v912 = vsub.s32 0, %v911
      %v913 = vrot.slane %v908, %v912
      %v916 = vsel %vm770, %v896, 0
      %v919 = vsel %vm770, %v897, 0
      %v922 = vsel %vm770, %v898, 0
      %v925 = vsel %vm770, %v899, 0
      %v928 = vsel %vm770, %v900, 0
      %v931 = vsel %vm770, %v901, 0
      %v934 = vsel %vm770, %v902, 0
      %v937 = vsel %vm770, %v903, 0
      %939 = vmatprep.subr.mxu0 0.0
      %940 = vmatpush1.msra.mxu0 %v904
      %941 = vmatprep.subr.mxu0 0.0
      %942 = vmatpush1.msra.mxu0 %v905
      %943 = vmatprep.subr.mxu0 0.0
      %944 = vmatpush1.msra.mxu0 %v906
      %945 = vmatprep.subr.mxu0 0.0
      %946 = vmatpush1.msra.mxu0 %v907
      %947 = vmatprep.subr.mxu0 0.0
      %948 = vmatpush1.msra.mxu0 0.0
      %949 = vmatprep.subr.mxu0 0.0
      %950 = vmatpush1.msra.mxu0 0.0
      %951 = vmatprep.subr.mxu0 0.0
      %952 = vmatpush1.msra.mxu0 0.0
      %953 = vmatprep.subr.mxu0 0.0
      %954 = vmatpush1.msra.mxu0 0.0
      %955 = vmatprep.subr.mxu0 0.0
      %956 = vmatpush1.msra.mxu0 0.0
      %957 = vmatprep.subr.mxu0 0.0
      %958 = vmatpush1.msra.mxu0 0.0
      %959 = vmatprep.subr.mxu0 0.0
      %960 = vmatpush1.msra.mxu0 0.0
      %961 = vmatprep.subr.mxu0 0.0
      %962 = vmatpush1.msra.mxu0 0.0
      %963 = vmatprep.subr.mxu0 0.0
      %964 = vmatpush1.msra.mxu0 0.0
      %965 = vmatprep.subr.mxu0 0.0
      %966 = vmatpush1.msra.mxu0 0.0
      %967 = vmatprep.subr.mxu0 0.0
      %968 = vmatpush1.msra.mxu0 0.0
      %969 = vmatprep.subr.mxu0 0.0
      %970 = vmatpush1.msra.mxu0 0.0
      %971 = vmatprep.subr.mxu0 0.0
      %972 = vmatpush1.msra.mxu0 0.0
      %973 = vmatprep.subr.mxu0 0.0
      %974 = vmatpush1.msra.mxu0 0.0
      %975 = vmatprep.subr.mxu0 0.0
      %976 = vmatpush1.msra.mxu0 0.0
      %977 = vmatprep.subr.mxu0 0.0
      %978 = vmatpush1.msra.mxu0 0.0
      %979 = vmatprep.subr.mxu0 0.0
      %980 = vmatpush1.msra.mxu0 0.0
      %981 = vmatprep.subr.mxu0 0.0
      %982 = vmatpush1.msra.mxu0 0.0
      %983 = vmatprep.subr.mxu0 0.0
      %984 = vmatpush1.msra.mxu0 0.0
      %985 = vmatprep.subr.mxu0 0.0
      %986 = vmatpush1.msra.mxu0 0.0
      %987 = vmatprep.subr.mxu0 0.0
      %988 = vmatpush1.msra.mxu0 0.0
      %989 = vmatprep.subr.mxu0 0.0
      %990 = vmatpush1.msra.mxu0 0.0
      %991 = vmatprep.subr.mxu0 0.0
      %992 = vmatpush1.msra.mxu0 0.0
      %993 = vmatprep.subr.mxu0 0.0
      %994 = vmatpush1.msra.mxu0 0.0
      %995 = vmatprep.subr.mxu0 0.0
      %996 = vmatpush1.msra.mxu0 0.0
      %997 = vmatprep.subr.mxu0 0.0
      %998 = vmatpush1.msra.mxu0 0.0
      %999 = vmatprep.subr.mxu0 0.0
      %1000 = vmatpush1.msra.mxu0 0.0
      %1001 = vmatprep.subr.mxu0 0.0
      %1002 = vmatpush1.msra.mxu0 0.0
      %1003 = vmatprep.mubr.f32.mxu0 0.0
      %1004 = vmatmul.mubr.f32.gmra.mrb[0].mxu0 %v916
      %v1005 = vpop.f32.mrb[0].mxu0
      %v1006 = vadd.f32 %v913, %v1005
      %v1007 = vpop.f32.mrb[0].mxu0
      %1008 = vmatprep.mubr.f32.mxu0 0.0
      %1009 = vmatmul.mubr.f32.gmra.mrb[0].mxu0 %v919
      %v1010 = vpop.f32.mrb[0].mxu0
      %v1011 = vadd.f32 %v913, %v1010
      %v1012 = vpop.f32.mrb[0].mxu0
      %1013 = vmatprep.mubr.f32.mxu0 0.0
      %1014 = vmatmul.mubr.f32.gmra.mrb[0].mxu0 %v922
      %v1015 = vpop.f32.mrb[0].mxu0
      %v1016 = vadd.f32 %v913, %v1015
      %v1017 = vpop.f32.mrb[0].mxu0
      %1018 = vmatprep.mubr.f32.mxu0 0.0
      %1019 = vmatmul.mubr.f32.gmra.mrb[0].mxu0 %v925
      %v1020 = vpop.f32.mrb[0].mxu0
      %v1021 = vadd.f32 %v913, %v1020
      %v1022 = vpop.f32.mrb[0].mxu0
      %1023 = vmatprep.mubr.f32.mxu0 0.0
      %1024 = vmatmul.mubr.f32.gmra.mrb[0].mxu0 %v928
      %v1025 = vpop.f32.mrb[0].mxu0
      %v1026 = vadd.f32 %v913, %v1025
      %v1027 = vpop.f32.mrb[0].mxu0
      %1028 = vmatprep.mubr.f32.mxu0 0.0
      %1029 = vmatmul.mubr.f32.gmra.mrb[0].mxu0 %v931
      %v1030 = vpop.f32.mrb[0].mxu0
      %v1031 = vadd.f32 %v913, %v1030
      %v1032 = vpop.f32.mrb[0].mxu0
      %1033 = vmatprep.mubr.f32.mxu0 0.0
      %1034 = vmatmul.mubr.f32.gmra.mrb[0].mxu0 %v934
      %v1035 = vpop.f32.mrb[0].mxu0
      %v1036 = vadd.f32 %v913, %v1035
      %v1037 = vpop.f32.mrb[0].mxu0
      %1038 = vmatprep.mubr.f32.mxu0 0.0
      %1039 = vmatmul.mubr.f32.gmra.mrb[0].mxu0 %v937
      %v1040 = vpop.f32.mrb[0].mxu0
      %v1041 = vadd.f32 %v913, %v1040
      %v1042 = vpop.f32.mrb[0].mxu0
      %1043 = vdwg.mxu0
      %v1044 = vmul.f32 %v1006, 0.5
      %v1045 = vmul.f32 %v1011, 0.5
      %v1046 = vmul.f32 %v1016, 0.5
      %v1047 = vmul.f32 %v1021, 0.5
      %v1048 = vmul.f32 %v1026, 0.5
      %v1049 = vmul.f32 %v1031, 0.5
      %v1050 = vmul.f32 %v1036, 0.5
      %v1051 = vmul.f32 %v1041, 0.5
      %v1052 = vmul.f32 %v1006, 0.70710677
      %v1053 = vmul.f32 %v1011, 0.70710677
      %v1054 = vmul.f32 %v1016, 0.70710677
      %v1055 = vmul.f32 %v1021, 0.70710677
      %v1056 = vmul.f32 %v1026, 0.70710677
      %v1057 = vmul.f32 %v1031, 0.70710677
      %v1058 = vmul.f32 %v1036, 0.70710677
      %v1059 = vmul.f32 %v1041, 0.70710677
      %v1060 = vand.u32 2147483647, %v1052
      %v1061 = vand.u32 2147483647, %v1053
      %v1062 = vand.u32 2147483647, %v1054
      %v1063 = vand.u32 2147483647, %v1055
      %v1064 = vand.u32 2147483647, %v1056
      %v1065 = vand.u32 2147483647, %v1057
      %v1066 = vand.u32 2147483647, %v1058
      %v1067 = vand.u32 2147483647, %v1059
      %v1068 = vmul.f32 %v1060, 0.3275911
      %v1069 = vmul.f32 %v1061, 0.3275911
      %v1070 = vmul.f32 %v1062, 0.3275911
      %v1071 = vmul.f32 %v1063, 0.3275911
      %v1072 = vmul.f32 %v1064, 0.3275911
      %v1073 = vmul.f32 %v1065, 0.3275911
      %v1074 = vmul.f32 %v1066, 0.3275911
      %v1075 = vmul.f32 %v1067, 0.3275911
      %v1076 = vadd.f32 %v1068, 1.0
      %v1077 = vadd.f32 %v1069, 1.0
      %v1078 = vadd.f32 %v1070, 1.0
      %v1079 = vadd.f32 %v1071, 1.0
      %v1080 = vadd.f32 %v1072, 1.0
      %v1081 = vadd.f32 %v1073, 1.0
      %v1082 = vadd.f32 %v1074, 1.0
      %v1083 = vadd.f32 %v1075, 1.0
      %v1084 = vrcp.pop %v1076
      %v1085 = vrcp.pop %v1077
      %v1086 = vrcp.pop %v1078
      %v1087 = vrcp.pop %v1079
      %v1088 = vrcp.pop %v1080
      %v1089 = vrcp.pop %v1081
      %v1090 = vrcp.pop %v1082
      %v1091 = vrcp.pop %v1083
      %v1092 = vmul.f32 %v1076, %v1084
      %v1093 = vmul.f32 %v1077, %v1085
      %v1094 = vmul.f32 %v1078, %v1086
      %v1095 = vmul.f32 %v1079, %v1087
      %v1096 = vmul.f32 %v1080, %v1088
      %v1097 = vmul.f32 %v1081, %v1089
      %v1098 = vmul.f32 %v1082, %v1090
      %v1099 = vmul.f32 %v1083, %v1091
      %v1100 = vsub.f32 2.0, %v1092
      %v1101 = vsub.f32 2.0, %v1093
      %v1102 = vsub.f32 2.0, %v1094
      %v1103 = vsub.f32 2.0, %v1095
      %v1104 = vsub.f32 2.0, %v1096
      %v1105 = vsub.f32 2.0, %v1097
      %v1106 = vsub.f32 2.0, %v1098
      %v1107 = vsub.f32 2.0, %v1099
      %v1108 = vmul.f32 %v1084, %v1100
      %v1109 = vmul.f32 %v1085, %v1101
      %v1110 = vmul.f32 %v1086, %v1102
      %v1111 = vmul.f32 %v1087, %v1103
      %v1112 = vmul.f32 %v1088, %v1104
      %v1113 = vmul.f32 %v1089, %v1105
      %v1114 = vmul.f32 %v1090, %v1106
      %v1115 = vmul.f32 %v1091, %v1107
      %v1116 = vmul.f32 %v1108, 1.0614054
      %v1117 = vmul.f32 %v1109, 1.0614054
      %v1118 = vmul.f32 %v1110, 1.0614054
      %v1119 = vmul.f32 %v1111, 1.0614054
      %v1120 = vmul.f32 %v1112, 1.0614054
      %v1121 = vmul.f32 %v1113, 1.0614054
      %v1122 = vmul.f32 %v1114, 1.0614054
      %v1123 = vmul.f32 %v1115, 1.0614054
      %v1124 = vadd.f32 %v1116, -1.4531521
      %v1125 = vadd.f32 %v1117, -1.4531521
      %v1126 = vadd.f32 %v1118, -1.4531521
      %v1127 = vadd.f32 %v1119, -1.4531521
      %v1128 = vadd.f32 %v1120, -1.4531521
      %v1129 = vadd.f32 %v1121, -1.4531521
      %v1130 = vadd.f32 %v1122, -1.4531521
      %v1131 = vadd.f32 %v1123, -1.4531521
      %v1132 = vmul.f32 %v1124, %v1108
      %v1133 = vmul.f32 %v1125, %v1109
      %v1134 = vmul.f32 %v1126, %v1110
      %v1135 = vmul.f32 %v1127, %v1111
      %v1136 = vmul.f32 %v1128, %v1112
      %v1137 = vmul.f32 %v1129, %v1113
      %v1138 = vmul.f32 %v1130, %v1114
      %v1139 = vmul.f32 %v1131, %v1115
      %v1140 = vadd.f32 %v1132, 1.4214138
      %v1141 = vadd.f32 %v1133, 1.4214138
      %v1142 = vadd.f32 %v1134, 1.4214138
      %v1143 = vadd.f32 %v1135, 1.4214138
      %v1144 = vadd.f32 %v1136, 1.4214138
      %v1145 = vadd.f32 %v1137, 1.4214138
      %v1146 = vadd.f32 %v1138, 1.4214138
      %v1147 = vadd.f32 %v1139, 1.4214138
      %v1148 = vmul.f32 %v1140, %v1108
      %v1149 = vmul.f32 %v1141, %v1109
      %v1150 = vmul.f32 %v1142, %v1110
      %v1151 = vmul.f32 %v1143, %v1111
      %v1152 = vmul.f32 %v1144, %v1112
      %v1153 = vmul.f32 %v1145, %v1113
      %v1154 = vmul.f32 %v1146, %v1114
      %v1155 = vmul.f32 %v1147, %v1115
      %v1156 = vadd.f32 %v1148, -0.28449672
      %v1157 = vadd.f32 %v1149, -0.28449672
      %v1158 = vadd.f32 %v1150, -0.28449672
      %v1159 = vadd.f32 %v1151, -0.28449672
      %v1160 = vadd.f32 %v1152, -0.28449672
      %v1161 = vadd.f32 %v1153, -0.28449672
      %v1162 = vadd.f32 %v1154, -0.28449672
      %v1163 = vadd.f32 %v1155, -0.28449672
      %v1164 = vmul.f32 %v1156, %v1108
      %v1165 = vmul.f32 %v1157, %v1109
      %v1166 = vmul.f32 %v1158, %v1110
      %v1167 = vmul.f32 %v1159, %v1111
      %v1168 = vmul.f32 %v1160, %v1112
      %v1169 = vmul.f32 %v1161, %v1113
      %v1170 = vmul.f32 %v1162, %v1114
      %v1171 = vmul.f32 %v1163, %v1115
      %v1172 = vadd.f32 %v1164, 0.2548296
      %v1173 = vadd.f32 %v1165, 0.2548296
      %v1174 = vadd.f32 %v1166, 0.2548296
      %v1175 = vadd.f32 %v1167, 0.2548296
      %v1176 = vadd.f32 %v1168, 0.2548296
      %v1177 = vadd.f32 %v1169, 0.2548296
      %v1178 = vadd.f32 %v1170, 0.2548296
      %v1179 = vadd.f32 %v1171, 0.2548296
      %v1180 = vmul.f32 %v1172, %v1108
      %v1181 = vmul.f32 %v1173, %v1109
      %v1182 = vmul.f32 %v1174, %v1110
      %v1183 = vmul.f32 %v1175, %v1111
      %v1184 = vmul.f32 %v1176, %v1112
      %v1185 = vmul.f32 %v1177, %v1113
      %v1186 = vmul.f32 %v1178, %v1114
      %v1187 = vmul.f32 %v1179, %v1115
      %v1188 = vsub.f32 0.0, %v1060
      %v1189 = vsub.f32 0.0, %v1061
      %v1190 = vsub.f32 0.0, %v1062
      %v1191 = vsub.f32 0.0, %v1063
      %v1192 = vsub.f32 0.0, %v1064
      %v1193 = vsub.f32 0.0, %v1065
      %v1194 = vsub.f32 0.0, %v1066
      %v1195 = vsub.f32 0.0, %v1067
      %v1196 = vmul.f32 %v1188, %v1060
      %v1197 = vmul.f32 %v1189, %v1061
      %v1198 = vmul.f32 %v1190, %v1062
      %v1199 = vmul.f32 %v1191, %v1063
      %v1200 = vmul.f32 %v1192, %v1064
      %v1201 = vmul.f32 %v1193, %v1065
      %v1202 = vmul.f32 %v1194, %v1066
      %v1203 = vmul.f32 %v1195, %v1067
      %v1204 = vmul.f32 %v1196, 1.442695
      %v1205 = vpow.pop %v1204
      %v1206 = vmul.f32 %v1197, 1.442695
      %v1207 = vpow.pop %v1206
      %v1208 = vmul.f32 %v1198, 1.442695
      %v1209 = vpow.pop %v1208
      %v1210 = vmul.f32 %v1199, 1.442695
      %v1211 = vpow.pop %v1210
      %v1212 = vmul.f32 %v1200, 1.442695
      %v1213 = vpow.pop %v1212
      %v1214 = vmul.f32 %v1201, 1.442695
      %v1215 = vpow.pop %v1214
      %v1216 = vmul.f32 %v1202, 1.442695
      %v1217 = vpow.pop %v1216
      %v1218 = vmul.f32 %v1203, 1.442695
      %v1219 = vpow.pop %v1218
      %v1220 = vmul.f32 %v1180, %v1205
      %v1221 = vmul.f32 %v1181, %v1207
      %v1222 = vmul.f32 %v1182, %v1209
      %v1223 = vmul.f32 %v1183, %v1211
      %v1224 = vmul.f32 %v1184, %v1213
      %v1225 = vmul.f32 %v1185, %v1215
      %v1226 = vmul.f32 %v1186, %v1217
      %v1227 = vmul.f32 %v1187, %v1219
      %v1228 = vsub.f32 1.0, %v1220
      %v1229 = vsub.f32 1.0, %v1221
      %v1230 = vsub.f32 1.0, %v1222
      %v1231 = vsub.f32 1.0, %v1223
      %v1232 = vsub.f32 1.0, %v1224
      %v1233 = vsub.f32 1.0, %v1225
      %v1234 = vsub.f32 1.0, %v1226
      %v1235 = vsub.f32 1.0, %v1227
      %vm1236 = vcmp.ge.f32.partialorder %v1052, 0.0
      %vm1237 = vcmp.ge.f32.partialorder %v1053, 0.0
      %vm1238 = vcmp.ge.f32.partialorder %v1054, 0.0
      %vm1239 = vcmp.ge.f32.partialorder %v1055, 0.0
      %vm1240 = vcmp.ge.f32.partialorder %v1056, 0.0
      %vm1241 = vcmp.ge.f32.partialorder %v1057, 0.0
      %vm1242 = vcmp.ge.f32.partialorder %v1058, 0.0
      %vm1243 = vcmp.ge.f32.partialorder %v1059, 0.0
      %v1244 = vsub.f32 0.0, %v1228
      %v1245 = vsub.f32 0.0, %v1229
      %v1246 = vsub.f32 0.0, %v1230
      %v1247 = vsub.f32 0.0, %v1231
      %v1248 = vsub.f32 0.0, %v1232
      %v1249 = vsub.f32 0.0, %v1233
      %v1250 = vsub.f32 0.0, %v1234
      %v1251 = vsub.f32 0.0, %v1235
      %v1252 = vsel %vm1236, %v1228, %v1244
      %v1253 = vsel %vm1237, %v1229, %v1245
      %v1254 = vsel %vm1238, %v1230, %v1246
      %v1255 = vsel %vm1239, %v1231, %v1247
      %v1256 = vsel %vm1240, %v1232, %v1248
      %v1257 = vsel %vm1241, %v1233, %v1249
      %v1258 = vsel %vm1242, %v1234, %v1250
      %v1259 = vsel %vm1243, %v1235, %v1251
      %v1260 = vadd.f32 %v1252, 1.0
      %v1261 = vadd.f32 %v1253, 1.0
      %v1262 = vadd.f32 %v1254, 1.0
      %v1263 = vadd.f32 %v1255, 1.0
      %v1264 = vadd.f32 %v1256, 1.0
      %v1265 = vadd.f32 %v1257, 1.0
      %v1266 = vadd.f32 %v1258, 1.0
      %v1267 = vadd.f32 %v1259, 1.0
      %v1268 = vmul.f32 %v1044, %v1260
      %v1269 = vmul.f32 %v1045, %v1261
      %v1270 = vmul.f32 %v1046, %v1262
      %v1271 = vmul.f32 %v1047, %v1263
      %v1272 = vmul.f32 %v1048, %v1264
      %v1273 = vmul.f32 %v1049, %v1265
      %v1274 = vmul.f32 %v1050, %v1266
      %v1275 = vmul.f32 %v1051, %v1267
      %v1276 = vld [vmem:[%s7] sm:$0x1]
      %v1277 = vld [vmem:[%s8] sm:$0x1]
      %v1278 = vsel %vm770, %v1268, 0.0
      %1279 = vadd.xlane.f32.xlu0 %v1278
      %v1280 = vpop.xlane.xlu0 %1279
      %v1281 = vsel %vm770, %v1269, 0.0
      %1282 = vadd.xlane.f32.xlu0 %v1281
      %v1283 = vpop.xlane.xlu0 %1282
      %v1284 = vsel %vm770, %v1270, 0.0
      %1285 = vadd.xlane.f32.xlu0 %v1284
      %v1286 = vpop.xlane.xlu0 %1285
      %v1287 = vsel %vm770, %v1271, 0.0
      %1288 = vadd.xlane.f32.xlu0 %v1287
      %v1289 = vpop.xlane.xlu0 %1288
      %v1290 = vsel %vm770, %v1272, 0.0
      %1291 = vadd.xlane.f32.xlu0 %v1290
      %v1292 = vpop.xlane.xlu0 %1291
      %v1293 = vsel %vm770, %v1273, 0.0
      %1294 = vadd.xlane.f32.xlu0 %v1293
      %v1295 = vpop.xlane.xlu0 %1294
      %v1296 = vsel %vm770, %v1274, 0.0
      %1297 = vadd.xlane.f32.xlu0 %v1296
      %v1298 = vpop.xlane.xlu0 %1297
      %v1299 = vsel %vm770, %v1275, 0.0
      %1300 = vadd.xlane.f32.xlu0 %v1299
      %v1301 = vpop.xlane.xlu0 %1300
      %v1302 = vmul.f32 %v1280, %v795
      %v1303 = vmul.f32 %v1283, %v795
      %v1304 = vmul.f32 %v1286, %v795
      %v1305 = vmul.f32 %v1289, %v795
      %v1306 = vmul.f32 %v1292, %v795
      %v1307 = vmul.f32 %v1295, %v795
      %v1308 = vmul.f32 %v1298, %v795
      %v1309 = vmul.f32 %v1301, %v795
      %v1310 = vsub.f32 %v1268, %v1302
      %v1311 = vsub.f32 %v1269, %v1303
      %v1312 = vsub.f32 %v1270, %v1304
      %v1313 = vsub.f32 %v1271, %v1305
      %v1314 = vsub.f32 %v1272, %v1306
      %v1315 = vsub.f32 %v1273, %v1307
      %v1316 = vsub.f32 %v1274, %v1308
      %v1317 = vsub.f32 %v1275, %v1309
      %v1318 = vmul.f32 %v1310, %v1310
      %v1319 = vmul.f32 %v1311, %v1311
      %v1320 = vmul.f32 %v1312, %v1312
      %v1321 = vmul.f32 %v1313, %v1313
      %v1322 = vmul.f32 %v1314, %v1314
      %v1323 = vmul.f32 %v1315, %v1315
      %v1324 = vmul.f32 %v1316, %v1316
      %v1325 = vmul.f32 %v1317, %v1317
      %v1326 = vsel %vm770, %v1318, 0.0
      %1327 = vadd.xlane.f32.xlu0 %v1326
      %v1328 = vpop.xlane.xlu0 %1327
      %v1329 = vsel %vm770, %v1319, 0.0
      %1330 = vadd.xlane.f32.xlu0 %v1329
      %v1331 = vpop.xlane.xlu0 %1330
      %v1332 = vsel %vm770, %v1320, 0.0
      %1333 = vadd.xlane.f32.xlu0 %v1332
      %v1334 = vpop.xlane.xlu0 %1333
      %v1335 = vsel %vm770, %v1321, 0.0
      %1336 = vadd.xlane.f32.xlu0 %v1335
      %v1337 = vpop.xlane.xlu0 %1336
      %v1338 = vsel %vm770, %v1322, 0.0
      %1339 = vadd.xlane.f32.xlu0 %v1338
      %v1340 = vpop.xlane.xlu0 %1339
      %v1341 = vsel %vm770, %v1323, 0.0
      %1342 = vadd.xlane.f32.xlu0 %v1341
      %v1343 = vpop.xlane.xlu0 %1342
      %v1344 = vsel %vm770, %v1324, 0.0
      %1345 = vadd.xlane.f32.xlu0 %v1344
      %v1346 = vpop.xlane.xlu0 %1345
      %v1347 = vsel %vm770, %v1325, 0.0
      %1348 = vadd.xlane.f32.xlu0 %v1347
      %v1349 = vpop.xlane.xlu0 %1348
      %v1350 = vmul.f32 %v1328, %v795
      %v1351 = vmul.f32 %v1331, %v795
      %v1352 = vmul.f32 %v1334, %v795
      %v1353 = vmul.f32 %v1337, %v795
      %v1354 = vmul.f32 %v1340, %v795
      %v1355 = vmul.f32 %v1343, %v795
      %v1356 = vmul.f32 %v1346, %v795
      %v1357 = vmul.f32 %v1349, %v795
      %v1358 = vadd.f32 %v1350, 1e-05
      %v1359 = vadd.f32 %v1351, 1e-05
      %v1360 = vadd.f32 %v1352, 1e-05
      %v1361 = vadd.f32 %v1353, 1e-05
      %v1362 = vadd.f32 %v1354, 1e-05
      %v1363 = vadd.f32 %v1355, 1e-05
      %v1364 = vadd.f32 %v1356, 1e-05
      %v1365 = vadd.f32 %v1357, 1e-05
      %v1366 = vrsqrt.pop %v1358
      %v1367 = vrsqrt.pop %v1359
      %v1368 = vrsqrt.pop %v1360
      %v1369 = vrsqrt.pop %v1361
      %v1370 = vrsqrt.pop %v1362
      %v1371 = vrsqrt.pop %v1363
      %v1372 = vrsqrt.pop %v1364
      %v1373 = vrsqrt.pop %v1365
      %v1374 = vmul.f32 %v1310, %v1366
      %v1375 = vmul.f32 %v1311, %v1367
      %v1376 = vmul.f32 %v1312, %v1368
      %v1377 = vmul.f32 %v1313, %v1369
      %v1378 = vmul.f32 %v1314, %v1370
      %v1379 = vmul.f32 %v1315, %v1371
      %v1380 = vmul.f32 %v1316, %v1372
      %v1381 = vmul.f32 %v1317, %v1373
      %v1383 = vlaneseq
      %v1384 = vshrl.u32 %v1383, 7
      %v1385 = vsub.s32 0, %v1384
      %v1386 = vrot.slane %v1276, %v1385
      %v1388 = vmul.f32 %v1374, %v1386
      %v1389 = vmul.f32 %v1375, %v1386
      %v1390 = vmul.f32 %v1376, %v1386
      %v1391 = vmul.f32 %v1377, %v1386
      %v1392 = vmul.f32 %v1378, %v1386
      %v1393 = vmul.f32 %v1379, %v1386
      %v1394 = vmul.f32 %v1380, %v1386
      %v1395 = vmul.f32 %v1381, %v1386
      %v1397 = vlaneseq
      %v1398 = vshrl.u32 %v1397, 7
      %v1399 = vsub.s32 0, %v1398
      %v1400 = vrot.slane %v1277, %v1399
      %v1402 = vadd.f32 %v1388, %v1400
      %v1403 = vadd.f32 %v1389, %v1400
      %v1404 = vadd.f32 %v1390, %v1400
      %v1405 = vadd.f32 %v1391, %v1400
      %v1406 = vadd.f32 %v1392, %v1400
      %v1407 = vadd.f32 %v1393, %v1400
      %v1408 = vadd.f32 %v1394, %v1400
      %v1409 = vadd.f32 %v1395, %v1400
      %v1410 = vld [vmem:[%s9] sm:$0xff]
      %v1411 = vld [vmem:[%s9 + $0x8] sm:$0xff]
      %v1412 = vld [vmem:[%s9 + $0x10] sm:$0xff]
      %v1413 = vld [vmem:[%s9 + $0x18] sm:$0xff]
      %v1414 = vld [vmem:[%s10] sm:$0x1]
      %v1416 = vlaneseq
      %v1417 = vshrl.u32 %v1416, 7
      %v1418 = vsub.s32 0, %v1417
      %v1419 = vrot.slane %v1414, %v1418
      %v1422 = vsel %vm770, %v1402, 0
      %v1425 = vsel %vm770, %v1403, 0
      %v1428 = vsel %vm770, %v1404, 0
      %v1431 = vsel %vm770, %v1405, 0
      %v1434 = vsel %vm770, %v1406, 0
      %v1437 = vsel %vm770, %v1407, 0
      %v1440 = vsel %vm770, %v1408, 0
      %v1443 = vsel %vm770, %v1409, 0
      %1445 = vmatprep.subr.mxu0 0.0
      %1446 = vmatpush1.msra.mxu0 %v1410
      %1447 = vmatprep.subr.mxu0 0.0
      %1448 = vmatpush1.msra.mxu0 %v1411
      %1449 = vmatprep.subr.mxu0 0.0
      %1450 = vmatpush1.msra.mxu0 %v1412
      %1451 = vmatprep.subr.mxu0 0.0
      %1452 = vmatpush1.msra.mxu0 %v1413
      %1453 = vmatprep.subr.mxu0 0.0
      %1454 = vmatpush1.msra.mxu0 0.0
      %1455 = vmatprep.subr.mxu0 0.0
      %1456 = vmatpush1.msra.mxu0 0.0
      %1457 = vmatprep.subr.mxu0 0.0
      %1458 = vmatpush1.msra.mxu0 0.0
      %1459 = vmatprep.subr.mxu0 0.0
      %1460 = vmatpush1.msra.mxu0 0.0
      %1461 = vmatprep.subr.mxu0 0.0
      %1462 = vmatpush1.msra.mxu0 0.0
      %1463 = vmatprep.subr.mxu0 0.0
      %1464 = vmatpush1.msra.mxu0 0.0
      %1465 = vmatprep.subr.mxu0 0.0
      %1466 = vmatpush1.msra.mxu0 0.0
      %1467 = vmatprep.subr.mxu0 0.0
      %1468 = vmatpush1.msra.mxu0 0.0
      %1469 = vmatprep.subr.mxu0 0.0
      %1470 = vmatpush1.msra.mxu0 0.0
      %1471 = vmatprep.subr.mxu0 0.0
      %1472 = vmatpush1.msra.mxu0 0.0
      %1473 = vmatprep.subr.mxu0 0.0
      %1474 = vmatpush1.msra.mxu0 0.0
      %1475 = vmatprep.subr.mxu0 0.0
      %1476 = vmatpush1.msra.mxu0 0.0
      %1477 = vmatprep.subr.mxu0 0.0
      %1478 = vmatpush1.msra.mxu0 0.0
      %1479 = vmatprep.subr.mxu0 0.0
      %1480 = vmatpush1.msra.mxu0 0.0
      %1481 = vmatprep.subr.mxu0 0.0
      %1482 = vmatpush1.msra.mxu0 0.0
      %1483 = vmatprep.subr.mxu0 0.0
      %1484 = vmatpush1.msra.mxu0 0.0
      %1485 = vmatprep.subr.mxu0 0.0
      %1486 = vmatpush1.msra.mxu0 0.0
      %1487 = vmatprep.subr.mxu0 0.0
      %1488 = vmatpush1.msra.mxu0 0.0
      %1489 = vmatprep.subr.mxu0 0.0
      %1490 = vmatpush1.msra.mxu0 0.0
      %1491 = vmatprep.subr.mxu0 0.0
      %1492 = vmatpush1.msra.mxu0 0.0
      %1493 = vmatprep.subr.mxu0 0.0
      %1494 = vmatpush1.msra.mxu0 0.0
      %1495 = vmatprep.subr.mxu0 0.0
      %1496 = vmatpush1.msra.mxu0 0.0
      %1497 = vmatprep.subr.mxu0 0.0
      %1498 = vmatpush1.msra.mxu0 0.0
      %1499 = vmatprep.subr.mxu0 0.0
      %1500 = vmatpush1.msra.mxu0 0.0
      %1501 = vmatprep.subr.mxu0 0.0
      %1502 = vmatpush1.msra.mxu0 0.0
      %1503 = vmatprep.subr.mxu0 0.0
      %1504 = vmatpush1.msra.mxu0 0.0
      %1505 = vmatprep.subr.mxu0 0.0
      %1506 = vmatpush1.msra.mxu0 0.0
      %1507 = vmatprep.subr.mxu0 0.0
      %1508 = vmatpush1.msra.mxu0 0.0
      %1509 = vmatprep.mubr.f32.mxu0 0.0
      %1510 = vmatmul.mubr.f32.gmra.mrb[0].mxu0 %v1422
      %v1511 = vpop.f32.mrb[0].mxu0
      %v1512 = vadd.f32 %v1419, %v1511
      %v1513 = vpop.f32.mrb[0].mxu0
      %1514 = vmatprep.mubr.f32.mxu0 0.0
      %1515 = vmatmul.mubr.f32.gmra.mrb[0].mxu0 %v1425
      %v1516 = vpop.f32.mrb[0].mxu0
      %v1517 = vadd.f32 %v1419, %v1516
      %v1518 = vpop.f32.mrb[0].mxu0
      %1519 = vmatprep.mubr.f32.mxu0 0.0
      %1520 = vmatmul.mubr.f32.gmra.mrb[0].mxu0 %v1428
      %v1521 = vpop.f32.mrb[0].mxu0
      %v1522 = vadd.f32 %v1419, %v1521
      %v1523 = vpop.f32.mrb[0].mxu0
      %1524 = vmatprep.mubr.f32.mxu0 0.0
      %1525 = vmatmul.mubr.f32.gmra.mrb[0].mxu0 %v1431
      %v1526 = vpop.f32.mrb[0].mxu0
      %v1527 = vadd.f32 %v1419, %v1526
      %v1528 = vpop.f32.mrb[0].mxu0
      %1529 = vmatprep.mubr.f32.mxu0 0.0
      %1530 = vmatmul.mubr.f32.gmra.mrb[0].mxu0 %v1434
      %v1531 = vpop.f32.mrb[0].mxu0
      %v1532 = vadd.f32 %v1419, %v1531
      %v1533 = vpop.f32.mrb[0].mxu0
      %1534 = vmatprep.mubr.f32.mxu0 0.0
      %1535 = vmatmul.mubr.f32.gmra.mrb[0].mxu0 %v1437
      %v1536 = vpop.f32.mrb[0].mxu0
      %v1537 = vadd.f32 %v1419, %v1536
      %v1538 = vpop.f32.mrb[0].mxu0
      %1539 = vmatprep.mubr.f32.mxu0 0.0
      %1540 = vmatmul.mubr.f32.gmra.mrb[0].mxu0 %v1440
      %v1541 = vpop.f32.mrb[0].mxu0
      %v1542 = vadd.f32 %v1419, %v1541
      %v1543 = vpop.f32.mrb[0].mxu0
      %1544 = vmatprep.mubr.f32.mxu0 0.0
      %1545 = vmatmul.mubr.f32.gmra.mrb[0].mxu0 %v1443
      %v1546 = vpop.f32.mrb[0].mxu0
      %v1547 = vadd.f32 %v1419, %v1546
      %v1548 = vpop.f32.mrb[0].mxu0
      %1549 = vdwg.mxu0
      %v1550 = vtanh.pop %v1512
      %v1551 = vtanh.pop %v1517
      %v1552 = vtanh.pop %v1522
      %v1553 = vtanh.pop %v1527
      %v1554 = vtanh.pop %v1532
      %v1555 = vtanh.pop %v1537
      %v1556 = vtanh.pop %v1542
      %v1557 = vtanh.pop %v1547
      %1558 = vst [vmem:[%s388] sm:$0xff] %v1550
      %1559 = vst [vmem:[%s388 + $0x8] sm:$0xff] %v1551
      %1560 = vst [vmem:[%s388 + $0x10] sm:$0xff] %v1552
      %1561 = vst [vmem:[%s388 + $0x18] sm:$0xff] %v1553
      %1562 = vst [vmem:[%s388 + $0x20] sm:$0xff] %v1554
      %1563 = vst [vmem:[%s388 + $0x28] sm:$0xff] %v1555
      %1564 = vst [vmem:[%s388 + $0x30] sm:$0xff] %v1556
      %1565 = vst [vmem:[%s388 + $0x38] sm:$0xff] %v1557
      %s1566 = smul.u32 8, %s22
      %p1567 = scmp.lt.s32.totalorder %s1566, 15
      %s1568 = scalar_select %p1567, %s1566, 15
      %s1569 = smul.addr %s1568, 8
      %s1570 = scalar_lea.vmem %s11, %s1569
      // Predicated region
      $region65: #{nn_seq_bn_mlp_forward.1} parent=63 // pred_check
        %p1571 = pneg %p276
      $region66: #{nn_seq_bn_mlp_forward.1} parent=63 // pred_check_branch
        %1573 = sbr.rel (%p1571) target = $region68
      $region67: #{nn_seq_bn_mlp_forward.1} parent=63 // pred_region
        %s1574 = smul.u32 8, %s22
      $region68: #{nn_seq_bn_mlp_forward.1} parent=63 // pred_fallthru
        _
    $region64: #{nn_seq_bn_mlp_forward.1} parent=5 // pred_fallthru
      _
    %p1575 = scmp.le.s32.totalorder 2, %s17
    // Predicated region
    $region69: #{nn_seq_bn_mlp_forward.1} parent=5 // pred_check
      %p1576 = pneg %p1575
    $region70: #{nn_seq_bn_mlp_forward.1} parent=5 // pred_check_branch
      %1578 = sbr.rel (%p1576) target = $region72
    $region71: #{nn_seq_bn_mlp_forward.1} parent=5 // pred_region
      %s1579 = ssub.s32 %s17, 2
      // Predicated region
      $region73: #{nn_seq_bn_mlp_forward.1} parent=71 // pred_check
        %p1580 = pneg %p282
      $region74: #{nn_seq_bn_mlp_forward.1} parent=71 // pred_check_branch
        %1582 = sbr.rel (%p1580) target = $region76
      $region75: #{nn_seq_bn_mlp_forward.1} parent=71 // pred_region
        %s1583 = smul.u32 8, %s23
        %p1584 = scmp.lt.s32.totalorder %s1583, 15
        %s1585 = scalar_select %p1584, %s1583, 15
        %s1586 = smul.addr %s1585, 8
        %s1587 = scalar_lea.vmem %s11, %s1586
      $region76: #{nn_seq_bn_mlp_forward.1} parent=71 // pred_fallthru
        _
    $region72: #{nn_seq_bn_mlp_forward.1} parent=5 // pred_fallthru
      _
  $region6: #{nn_seq_bn_mlp_forward.1} parent=0 // loop_footer
    %s21 = sadd.s32 1, %s17
  $region7: #{nn_seq_bn_mlp_forward.1} parent=0 // loop_footer_branch
    %16 = sbr.rel target = $region3
  $region8: #{nn_seq_bn_mlp_forward.1} parent=0 // loop_exit
    _

</llo_original>
